<compile_context>
chip_gen: v5e
topology: v5e:2x2
jax: 0.10.0
libtpu: 0.0.40
codegen_flags: <defaults>
</compile_context>

<pallas_src>
import numpy as np
import jax
import jax.numpy as jnp
from jax import lax
from jax.experimental import pallas as pl
from jax.experimental.pallas import tpu as pltpu


# ---------------------------------------------------------------------------
# Shared complex-arithmetic body (operates on f32 planes, returns h' planes).
# ---------------------------------------------------------------------------
def _complex_step(a_re, a_im, d_re, d_im, x_re, x_im, b_re, b_im, h_re, h_im):
    # z = A * delta            (complex multiply; broadcasts to (B, D, N))
    z_re = a_re * d_re - a_im * d_im
    z_im = a_re * d_im + a_im * d_re

    # A' = exp(-z) = exp(-Re z) * (cos(Im z) - i sin(Im z))
    mag = jnp.exp(-z_re)
    ap_re = mag * jnp.cos(z_im)
    ap_im = -(mag * jnp.sin(z_im))

    # B' = B_t * delta
    bp_re = b_re * d_re - b_im * d_im
    bp_im = b_re * d_im + b_im * d_re

    # h' = A' * h_prev + B' * x_gated
    new_re = (ap_re * h_re - ap_im * h_im) + (bp_re * x_re - bp_im * x_im)
    new_im = (ap_re * h_im + ap_im * h_re) + (bp_re * x_im + bp_im * x_re)
    return new_re, new_im


# ---------------------------------------------------------------------------
# Single-timestep kernel (matches RecurrentBlock.forward exactly).
# ---------------------------------------------------------------------------
def _step_kernel(a_re_ref, a_im_ref, d_re_ref, d_im_ref,
                 x_re_ref, x_im_ref, b_re_ref, b_im_ref,
                 h_re_ref, h_im_ref, o_re_ref, o_im_ref):
    new_re, new_im = _complex_step(
        a_re_ref[...], a_im_ref[...],        # (1, D, N)
        d_re_ref[...], d_im_ref[...],        # (B, D, 1)
        x_re_ref[...], x_im_ref[...],        # (B, D, 1)
        b_re_ref[...], b_im_ref[...],        # (B, 1, N)
        h_re_ref[...], h_im_ref[...],        # (B, D, N)
    )
    o_re_ref[...] = new_re
    o_im_ref[...] = new_im


def recurrent_step_planes(a_re, a_im, d_re, d_im, x_re, x_im,
                          b_re, b_im, h_re, h_im):
    """Plane-form single step. a:(D,N) d,x:(B,D) b:(B,N) h:(B,D,N), all f32.
    Returns (h'_re, h'_im), each (B, D, N) float32."""
    Bsz, D, N = h_re.shape

    a3 = lambda p: p.reshape(1, D, N)
    dx = lambda p: p.reshape(Bsz, D, 1)
    bb = lambda p: p.reshape(Bsz, 1, N)

    def const_spec(shape):
        return pl.BlockSpec(shape, lambda i: (0, 0, 0))

    out = pl.pallas_call(
        _step_kernel,
        grid=(1,),
        in_specs=[
            const_spec((1, D, N)), const_spec((1, D, N)),
            const_spec((Bsz, D, 1)), const_spec((Bsz, D, 1)),
            const_spec((Bsz, D, 1)), const_spec((Bsz, D, 1)),
            const_spec((Bsz, 1, N)), const_spec((Bsz, 1, N)),
            const_spec((Bsz, D, N)), const_spec((Bsz, D, N)),
        ],
        out_specs=[const_spec((Bsz, D, N)), const_spec((Bsz, D, N))],
        out_shape=[jax.ShapeDtypeStruct((Bsz, D, N), jnp.float32)] * 2,
        compiler_params=pltpu.CompilerParams(
            dimension_semantics=("arbitrary",)),
    )(a3(a_re), a3(a_im), dx(d_re), dx(d_im), dx(x_re), dx(x_im),
      bb(b_re), bb(b_im), h_re, h_im)
    return out[0], out[1]


def recurrent_block_forward(state_transition_matrix, x_gated_t, delta_t, B_t, h_prev):
    """Complex64 boundary wrapper; matches RecurrentBlock.forward semantics."""
    o_re, o_im = recurrent_step_planes(
        jnp.real(state_transition_matrix), jnp.imag(state_transition_matrix),
        jnp.real(delta_t), jnp.imag(delta_t),
        jnp.real(x_gated_t), jnp.imag(x_gated_t),
        jnp.real(B_t), jnp.imag(B_t),
        jnp.real(h_prev), jnp.imag(h_prev))
    return lax.complex(o_re, o_im)


# ---------------------------------------------------------------------------
# T-fused scan kernel: one pallas_call runs T recurrent steps with h resident
# in VMEM scratch (the big structural win from the perf review).
# ---------------------------------------------------------------------------
def _scan_kernel(a_re_ref, a_im_ref, h0_re_ref, h0_im_ref,
                 d_re_ref, d_im_ref, x_re_ref, x_im_ref,
                 b_re_ref, b_im_ref,
                 o_re_ref, o_im_ref, hs_re, hs_im):
    @pl.when(pl.program_id(0) == 0)
    def _():
        hs_re[...] = h0_re_ref[...]
        hs_im[...] = h0_im_ref[...]

    new_re, new_im = _complex_step(
        a_re_ref[...], a_im_ref[...],        # (1, D, N)   resident
        d_re_ref[...], d_im_ref[...],        # (B, D, 1)   per-step stream
        x_re_ref[...], x_im_ref[...],        # (B, D, 1)   per-step stream
        b_re_ref[...], b_im_ref[...],        # (B, 1, N)   per-step stream
        hs_re[...], hs_im[...],              # (B, D, N)   VMEM-resident state
    )
    hs_re[...] = new_re
    hs_im[...] = new_im
    o_re_ref[...] = new_re
    o_im_ref[...] = new_im


def recurrent_scan_planes(a_re, a_im, d_re, d_im, x_re, x_im,
                          b_re, b_im, h0_re, h0_im):
    """Plane-form T-step scan. a:(D,N) d,x:(T,B,D) b:(T,B,N) h0:(B,D,N).
    Returns (h_re, h_im), each (T, B, D, N) float32 (state after each step)."""
    T, Bsz, D = d_re.shape
    N = b_re.shape[-1]

    a3 = lambda p: p.reshape(1, D, N)
    dx = lambda p: p.reshape(T, Bsz, D, 1)
    bb = lambda p: p.reshape(T, Bsz, 1, N)

    resident = lambda shape: pl.BlockSpec(shape, lambda t: (0, 0, 0))
    stream = lambda shape: pl.BlockSpec(shape, lambda t: (t, 0, 0, 0))

    out = pl.pallas_call(
        _scan_kernel,
        grid=(T,),
        in_specs=[
            resident((1, D, N)), resident((1, D, N)),          # A planes
            resident((Bsz, D, N)), resident((Bsz, D, N)),       # h0 planes
            stream((None, Bsz, D, 1)), stream((None, Bsz, D, 1)),  # delta
            stream((None, Bsz, D, 1)), stream((None, Bsz, D, 1)),  # x_gated
            stream((None, Bsz, 1, N)), stream((None, Bsz, 1, N)),  # B_t
        ],
        out_specs=[stream((None, Bsz, D, N)), stream((None, Bsz, D, N))],
        out_shape=[jax.ShapeDtypeStruct((T, Bsz, D, N), jnp.float32)] * 2,
        scratch_shapes=[pltpu.VMEM((Bsz, D, N), jnp.float32),
                        pltpu.VMEM((Bsz, D, N), jnp.float32)],
        compiler_params=pltpu.CompilerParams(
            dimension_semantics=("arbitrary",)),
    )(a3(a_re), a3(a_im), h0_re, h0_im,
      dx(d_re), dx(d_im), dx(x_re), dx(x_im), bb(b_re), bb(b_im))
    return out[0], out[1]


def recurrent_scan_forward(state_transition_matrix, x_gated_seq, delta_seq, B_seq, h0):
    """Complex64 wrapper over the T-fused scan: applies forward() T times."""
    o_re, o_im = recurrent_scan_planes(
        jnp.real(state_transition_matrix), jnp.imag(state_transition_matrix),
        jnp.real(delta_seq), jnp.imag(delta_seq),
        jnp.real(x_gated_seq), jnp.imag(x_gated_seq),
        jnp.real(B_seq), jnp.imag(B_seq),
        jnp.real(h0), jnp.imag(h0))
    return lax.complex(o_re, o_im)


# ---------------------------------------------------------------------------
# Pure-JAX reference (mirrors the PyTorch forward).
# ---------------------------------------------------------------------------
def _reference(state_transition_matrix, x_gated_t, delta_t, B_t, h_prev):
    A_prime = jnp.exp(-jnp.einsum('dn,bd->bdn', state_transition_matrix, delta_t))
    B_prime = jnp.einsum('bn,bd->bdn', B_t, delta_t)
    return A_prime * h_prev + B_prime * x_gated_t[:, :, None]


if __name__ == "__main__":
    # Shapes consistent with the module: embedding D = 16, state-space N = 128,
    # batch B = 2, short sequence T = 8 for the fused scan.
    Bsz, D, N, T = 2, 16, 128, 8

    key = jax.random.PRNGKey(0)
    ks = jax.random.split(key, 16)

    # --- deterministic parameter init, mirroring RecurrentBlock.__init__ ---
    real_t = jnp.log(-jnp.log(jax.random.uniform(ks[0], (D, N),
                                                 minval=0.999, maxval=1.0)))
    img_t = jax.random.uniform(ks[1], (D, N), minval=0.0, maxval=np.pi / 10.0)
    state_transition_matrix = (jnp.exp(-jnp.exp(real_t)) *
                               jnp.exp(1j * img_t)).astype(jnp.complex64)

    def cplx(kr, ki, shape, scale=1.0):
        return (scale * (jax.random.normal(kr, shape) +
                         1j * jax.random.normal(ki, shape))).astype(jnp.complex64)

    # --- single-timestep forward check (module.forward semantics) ---
    x_gated_t = cplx(ks[2], ks[3], (Bsz, D))
    delta_t = cplx(ks[4], ks[5], (Bsz, D))
    B_t = cplx(ks[6], ks[7], (Bsz, N))
    h_prev = cplx(ks[8], ks[9], (Bsz, D, N))

    h_prime = recurrent_block_forward(state_transition_matrix,
                                      x_gated_t, delta_t, B_t, h_prev)
    h_prime = jax.block_until_ready(h_prime)
    ref = _reference(state_transition_matrix, x_gated_t, delta_t, B_t, h_prev)
    assert h_prime.shape == (Bsz, D, N) and h_prime.dtype == jnp.complex64
    np.testing.assert_allclose(np.asarray(h_prime), np.asarray(ref),
                               rtol=1e-3, atol=1e-3)

    # --- T-fused scan check (forward applied T times, h resident in VMEM) ---
    x_seq = cplx(ks[10], ks[11], (T, Bsz, D))
    delta_seq = cplx(ks[12], ks[13], (T, Bsz, D), scale=0.1)
    B_seq = cplx(ks[14], ks[15], (T, Bsz, N))

    h_seq = recurrent_scan_forward(state_transition_matrix,
                                   x_seq, delta_seq, B_seq, h_prev)
    h_seq = jax.block_until_ready(h_seq)

    h = h_prev
    ref_steps = []
    for t in range(T):
        h = _reference(state_transition_matrix, x_seq[t], delta_seq[t], B_seq[t], h)
        ref_steps.append(h)
    ref_seq = jnp.stack(ref_steps, axis=0)

    assert h_seq.shape == (T, Bsz, D, N) and h_seq.dtype == jnp.complex64
    np.testing.assert_allclose(np.asarray(h_seq), np.asarray(ref_seq),
                               rtol=1e-3, atol=1e-3)

    print("KERNEL_OK")
</pallas_src>

<mosaic_0001>
module attributes {stable_mosaic.version = 11 : i64} {
  func.func @_step_kernel(%arg0: i32, %arg1: memref<1x16x128xf32, #tpu.memory_space<vmem>>, %arg2: memref<1x16x128xf32, #tpu.memory_space<vmem>>, %arg3: memref<2x16x1xf32, #tpu.memory_space<vmem>>, %arg4: memref<2x16x1xf32, #tpu.memory_space<vmem>>, %arg5: memref<2x16x1xf32, #tpu.memory_space<vmem>>, %arg6: memref<2x16x1xf32, #tpu.memory_space<vmem>>, %arg7: memref<2x1x128xf32, #tpu.memory_space<vmem>>, %arg8: memref<2x1x128xf32, #tpu.memory_space<vmem>>, %arg9: memref<2x16x128xf32, #tpu.memory_space<vmem>>, %arg10: memref<2x16x128xf32, #tpu.memory_space<vmem>>, %arg11: memref<2x16x128xf32, #tpu.memory_space<vmem>>, %arg12: memref<2x16x128xf32, #tpu.memory_space<vmem>>) attributes {dimension_semantics = [#tpu.dimension_semantics<arbitrary>], iteration_bounds = array<i64: 1>, scalar_prefetch = 0 : i64, scratch_operands = 0 : i64, tpu.core_type = #tpu.core_type<tc>, window_params = [{pipeline_mode = #tpu.pipeline_mode<synchronous>, transform_indices = @transform_0, window_bounds = array<i64: 1, 16, 128>}, {pipeline_mode = #tpu.pipeline_mode<synchronous>, transform_indices = @transform_1, window_bounds = array<i64: 1, 16, 128>}, {pipeline_mode = #tpu.pipeline_mode<synchronous>, transform_indices = @transform_2, window_bounds = array<i64: 2, 16, 1>}, {pipeline_mode = #tpu.pipeline_mode<synchronous>, transform_indices = @transform_3, window_bounds = array<i64: 2, 16, 1>}, {pipeline_mode = #tpu.pipeline_mode<synchronous>, transform_indices = @transform_4, window_bounds = array<i64: 2, 16, 1>}, {pipeline_mode = #tpu.pipeline_mode<synchronous>, transform_indices = @transform_5, window_bounds = array<i64: 2, 16, 1>}, {pipeline_mode = #tpu.pipeline_mode<synchronous>, transform_indices = @transform_6, window_bounds = array<i64: 2, 1, 128>}, {pipeline_mode = #tpu.pipeline_mode<synchronous>, transform_indices = @transform_7, window_bounds = array<i64: 2, 1, 128>}, {pipeline_mode = #tpu.pipeline_mode<synchronous>, transform_indices = @transform_8, window_bounds = array<i64: 2, 16, 128>}, {pipeline_mode = #tpu.pipeline_mode<synchronous>, transform_indices = @transform_9, window_bounds = array<i64: 2, 16, 128>}, {pipeline_mode = #tpu.pipeline_mode<synchronous>, transform_indices = @transform_10, window_bounds = array<i64: 2, 16, 128>}, {pipeline_mode = #tpu.pipeline_mode<synchronous>, transform_indices = @transform_11, window_bounds = array<i64: 2, 16, 128>}]} {
    %c0 = arith.constant 0 : index
    %c0_0 = arith.constant 0 : index
    %c0_1 = arith.constant 0 : index
    %0 = vector.load %arg1[%c0, %c0_0, %c0_1] : memref<1x16x128xf32, #tpu.memory_space<vmem>>, vector<1x16x128xf32>
    %c0_2 = arith.constant 0 : index
    %c0_3 = arith.constant 0 : index
    %c0_4 = arith.constant 0 : index
    %1 = vector.load %arg2[%c0_2, %c0_3, %c0_4] : memref<1x16x128xf32, #tpu.memory_space<vmem>>, vector<1x16x128xf32>
    %c0_5 = arith.constant 0 : index
    %c0_6 = arith.constant 0 : index
    %c0_7 = arith.constant 0 : index
    %2 = vector.load %arg3[%c0_5, %c0_6, %c0_7] : memref<2x16x1xf32, #tpu.memory_space<vmem>>, vector<2x16x1xf32>
    %c0_8 = arith.constant 0 : index
    %c0_9 = arith.constant 0 : index
    %c0_10 = arith.constant 0 : index
    %3 = vector.load %arg4[%c0_8, %c0_9, %c0_10] : memref<2x16x1xf32, #tpu.memory_space<vmem>>, vector<2x16x1xf32>
    %c0_11 = arith.constant 0 : index
    %c0_12 = arith.constant 0 : index
    %c0_13 = arith.constant 0 : index
    %4 = vector.load %arg5[%c0_11, %c0_12, %c0_13] : memref<2x16x1xf32, #tpu.memory_space<vmem>>, vector<2x16x1xf32>
    %c0_14 = arith.constant 0 : index
    %c0_15 = arith.constant 0 : index
    %c0_16 = arith.constant 0 : index
    %5 = vector.load %arg6[%c0_14, %c0_15, %c0_16] : memref<2x16x1xf32, #tpu.memory_space<vmem>>, vector<2x16x1xf32>
    %c0_17 = arith.constant 0 : index
    %c0_18 = arith.constant 0 : index
    %c0_19 = arith.constant 0 : index
    %6 = vector.load %arg7[%c0_17, %c0_18, %c0_19] : memref<2x1x128xf32, #tpu.memory_space<vmem>>, vector<2x1x128xf32>
    %c0_20 = arith.constant 0 : index
    %c0_21 = arith.constant 0 : index
    %c0_22 = arith.constant 0 : index
    %7 = vector.load %arg8[%c0_20, %c0_21, %c0_22] : memref<2x1x128xf32, #tpu.memory_space<vmem>>, vector<2x1x128xf32>
    %c0_23 = arith.constant 0 : index
    %c0_24 = arith.constant 0 : index
    %c0_25 = arith.constant 0 : index
    %8 = vector.load %arg9[%c0_23, %c0_24, %c0_25] : memref<2x16x128xf32, #tpu.memory_space<vmem>>, vector<2x16x128xf32>
    %c0_26 = arith.constant 0 : index
    %c0_27 = arith.constant 0 : index
    %c0_28 = arith.constant 0 : index
    %9 = vector.load %arg10[%c0_26, %c0_27, %c0_28] : memref<2x16x128xf32, #tpu.memory_space<vmem>>, vector<2x16x128xf32>
    %10 = vector.broadcast %0 : vector<1x16x128xf32> to vector<2x16x128xf32>
    %11 = vector.broadcast %2 : vector<2x16x1xf32> to vector<2x16x128xf32>
    %12 = arith.mulf %10, %11 : vector<2x16x128xf32>
    %13 = vector.broadcast %1 : vector<1x16x128xf32> to vector<2x16x128xf32>
    %14 = vector.broadcast %3 : vector<2x16x1xf32> to vector<2x16x128xf32>
    %15 = arith.mulf %13, %14 : vector<2x16x128xf32>
    %16 = arith.subf %12, %15 : vector<2x16x128xf32>
    %17 = vector.broadcast %0 : vector<1x16x128xf32> to vector<2x16x128xf32>
    %18 = vector.broadcast %3 : vector<2x16x1xf32> to vector<2x16x128xf32>
    %19 = arith.mulf %17, %18 : vector<2x16x128xf32>
    %20 = vector.broadcast %1 : vector<1x16x128xf32> to vector<2x16x128xf32>
    %21 = vector.broadcast %2 : vector<2x16x1xf32> to vector<2x16x128xf32>
    %22 = arith.mulf %20, %21 : vector<2x16x128xf32>
    %23 = arith.addf %19, %22 : vector<2x16x128xf32>
    %cst = arith.constant 0.000000e+00 : f32
    %24 = vector.broadcast %cst : f32 to vector<2x16x128xf32>
    %25 = arith.subf %24, %16 : vector<2x16x128xf32>
    %26 = math.exp %25 : vector<2x16x128xf32>
    %27 = math.cos %23 : vector<2x16x128xf32>
    %28 = arith.mulf %26, %27 : vector<2x16x128xf32>
    %29 = math.sin %23 : vector<2x16x128xf32>
    %30 = arith.mulf %26, %29 : vector<2x16x128xf32>
    %cst_29 = arith.constant 0.000000e+00 : f32
    %31 = vector.broadcast %cst_29 : f32 to vector<2x16x128xf32>
    %32 = arith.subf %31, %30 : vector<2x16x128xf32>
    %33 = vector.broadcast %6 : vector<2x1x128xf32> to vector<2x16x128xf32>
    %34 = vector.broadcast %2 : vector<2x16x1xf32> to vector<2x16x128xf32>
    %35 = arith.mulf %33, %34 : vector<2x16x128xf32>
    %36 = vector.broadcast %7 : vector<2x1x128xf32> to vector<2x16x128xf32>
    %37 = vector.broadcast %3 : vector<2x16x1xf32> to vector<2x16x128xf32>
    %38 = arith.mulf %36, %37 : vector<2x16x128xf32>
    %39 = arith.subf %35, %38 : vector<2x16x128xf32>
    %40 = vector.broadcast %6 : vector<2x1x128xf32> to vector<2x16x128xf32>
    %41 = vector.broadcast %3 : vector<2x16x1xf32> to vector<2x16x128xf32>
    %42 = arith.mulf %40, %41 : vector<2x16x128xf32>
    %43 = vector.broadcast %7 : vector<2x1x128xf32> to vector<2x16x128xf32>
    %44 = vector.broadcast %2 : vector<2x16x1xf32> to vector<2x16x128xf32>
    %45 = arith.mulf %43, %44 : vector<2x16x128xf32>
    %46 = arith.addf %42, %45 : vector<2x16x128xf32>
    %47 = arith.mulf %28, %8 : vector<2x16x128xf32>
    %48 = arith.mulf %32, %9 : vector<2x16x128xf32>
    %49 = arith.subf %47, %48 : vector<2x16x128xf32>
    %50 = vector.broadcast %4 : vector<2x16x1xf32> to vector<2x16x128xf32>
    %51 = arith.mulf %39, %50 : vector<2x16x128xf32>
    %52 = vector.broadcast %5 : vector<2x16x1xf32> to vector<2x16x128xf32>
    %53 = arith.mulf %46, %52 : vector<2x16x128xf32>
    %54 = arith.subf %51, %53 : vector<2x16x128xf32>
    %55 = arith.addf %49, %54 : vector<2x16x128xf32>
    %56 = arith.mulf %28, %9 : vector<2x16x128xf32>
    %57 = arith.mulf %32, %8 : vector<2x16x128xf32>
    %58 = arith.addf %56, %57 : vector<2x16x128xf32>
    %59 = vector.broadcast %5 : vector<2x16x1xf32> to vector<2x16x128xf32>
    %60 = arith.mulf %39, %59 : vector<2x16x128xf32>
    %61 = vector.broadcast %4 : vector<2x16x1xf32> to vector<2x16x128xf32>
    %62 = arith.mulf %46, %61 : vector<2x16x128xf32>
    %63 = arith.addf %60, %62 : vector<2x16x128xf32>
    %64 = arith.addf %58, %63 : vector<2x16x128xf32>
    %c0_30 = arith.constant 0 : index
    %c0_31 = arith.constant 0 : index
    %c0_32 = arith.constant 0 : index
    %65 = vector.load %arg11[%c0_30, %c0_31, %c0_32] : memref<2x16x128xf32, #tpu.memory_space<vmem>>, vector<2x16x128xf32>
    tpu.vector_store %arg11[%c0_30, %c0_31, %c0_32], %55 {strides = array<i32>} : memref<2x16x128xf32, #tpu.memory_space<vmem>>, vector<2x16x128xf32>,
    %c0_33 = arith.constant 0 : index
    %c0_34 = arith.constant 0 : index
    %c0_35 = arith.constant 0 : index
    %66 = vector.load %arg12[%c0_33, %c0_34, %c0_35] : memref<2x16x128xf32, #tpu.memory_space<vmem>>, vector<2x16x128xf32>
    tpu.vector_store %arg12[%c0_33, %c0_34, %c0_35], %64 {strides = array<i32>} : memref<2x16x128xf32, #tpu.memory_space<vmem>>, vector<2x16x128xf32>,
    return
  }
  func.func @transform_0(%arg0: i32) -> (i32, i32, i32) {
    %c0_i32 = arith.constant 0 : i32
    %c0_i32_0 = arith.constant 0 : i32
    %c0_i32_1 = arith.constant 0 : i32
    %c0_i32_2 = arith.constant 0 : i32
    return %c0_i32, %c0_i32_0, %c0_i32_1 : i32, i32, i32
  }
  func.func @transform_1(%arg0: i32) -> (i32, i32, i32) {
    %c0_i32 = arith.constant 0 : i32
    %c0_i32_0 = arith.constant 0 : i32
    %c0_i32_1 = arith.constant 0 : i32
    %c0_i32_2 = arith.constant 0 : i32
    return %c0_i32, %c0_i32_0, %c0_i32_1 : i32, i32, i32
  }
  func.func @transform_2(%arg0: i32) -> (i32, i32, i32) {
    %c0_i32 = arith.constant 0 : i32
    %c0_i32_0 = arith.constant 0 : i32
    %c0_i32_1 = arith.constant 0 : i32
    %c0_i32_2 = arith.constant 0 : i32
    return %c0_i32, %c0_i32_0, %c0_i32_1 : i32, i32, i32
  }
  func.func @transform_3(%arg0: i32) -> (i32, i32, i32) {
    %c0_i32 = arith.constant 0 : i32
    %c0_i32_0 = arith.constant 0 : i32
    %c0_i32_1 = arith.constant 0 : i32
    %c0_i32_2 = arith.constant 0 : i32
    return %c0_i32, %c0_i32_0, %c0_i32_1 : i32, i32, i32
  }
  func.func @transform_4(%arg0: i32) -> (i32, i32, i32) {
    %c0_i32 = arith.constant 0 : i32
    %c0_i32_0 = arith.constant 0 : i32
    %c0_i32_1 = arith.constant 0 : i32
    %c0_i32_2 = arith.constant 0 : i32
    return %c0_i32, %c0_i32_0, %c0_i32_1 : i32, i32, i32
  }
  func.func @transform_5(%arg0: i32) -> (i32, i32, i32) {
    %c0_i32 = arith.constant 0 : i32
    %c0_i32_0 = arith.constant 0 : i32
    %c0_i32_1 = arith.constant 0 : i32
    %c0_i32_2 = arith.constant 0 : i32
    return %c0_i32, %c0_i32_0, %c0_i32_1 : i32, i32, i32
  }
  func.func @transform_6(%arg0: i32) -> (i32, i32, i32) {
    %c0_i32 = arith.constant 0 : i32
    %c0_i32_0 = arith.constant 0 : i32
    %c0_i32_1 = arith.constant 0 : i32
    %c0_i32_2 = arith.constant 0 : i32
    return %c0_i32, %c0_i32_0, %c0_i32_1 : i32, i32, i32
  }
  func.func @transform_7(%arg0: i32) -> (i32, i32, i32) {
    %c0_i32 = arith.constant 0 : i32
    %c0_i32_0 = arith.constant 0 : i32
    %c0_i32_1 = arith.constant 0 : i32
    %c0_i32_2 = arith.constant 0 : i32
    return %c0_i32, %c0_i32_0, %c0_i32_1 : i32, i32, i32
  }
  func.func @transform_8(%arg0: i32) -> (i32, i32, i32) {
    %c0_i32 = arith.constant 0 : i32
    %c0_i32_0 = arith.constant 0 : i32
    %c0_i32_1 = arith.constant 0 : i32
    %c0_i32_2 = arith.constant 0 : i32
    return %c0_i32, %c0_i32_0, %c0_i32_1 : i32, i32, i32
  }
  func.func @transform_9(%arg0: i32) -> (i32, i32, i32) {
    %c0_i32 = arith.constant 0 : i32
    %c0_i32_0 = arith.constant 0 : i32
    %c0_i32_1 = arith.constant 0 : i32
    %c0_i32_2 = arith.constant 0 : i32
    return %c0_i32, %c0_i32_0, %c0_i32_1 : i32, i32, i32
  }
  func.func @transform_10(%arg0: i32) -> (i32, i32, i32) {
    %c0_i32 = arith.constant 0 : i32
    %c0_i32_0 = arith.constant 0 : i32
    %c0_i32_1 = arith.constant 0 : i32
    %c0_i32_2 = arith.constant 0 : i32
    return %c0_i32, %c0_i32_0, %c0_i32_1 : i32, i32, i32
  }
  func.func @transform_11(%arg0: i32) -> (i32, i32, i32) {
    %c0_i32 = arith.constant 0 : i32
    %c0_i32_0 = arith.constant 0 : i32
    %c0_i32_1 = arith.constant 0 : i32
    %c0_i32_2 = arith.constant 0 : i32
    return %c0_i32, %c0_i32_0, %c0_i32_1 : i32, i32, i32
  }
}

</mosaic_0001>

<llo_original>
// kernel: tpu_custom_call.1
$region0: #{tpu_custom_call.1}
  #allocation0 [shape = 'u32[]', space=smem, size = 0x4, offset = 0x4, fixed_abs, tag = 'smem constant byte address 0x4 - core index']
  #allocation1 [shape = 'u32[72,128]{1,0:T(1,128)}', space=vmem, size = 0x9000, scoped, tag = 'internal scratch']
  %s0 = inlined_call_operand.vmem [shape: f32[1,16,128], index: 0, kind: input, shape index: {}]
  %s1 = inlined_call_operand.vmem [shape: f32[1,16,128], index: 1, kind: input, shape index: {}]
  %s2 = inlined_call_operand.vmem [shape: f32[2,16,1], index: 2, kind: input, shape index: {}]
  %s3 = inlined_call_operand.vmem [shape: f32[2,16,1], index: 3, kind: input, shape index: {}]
  %s4 = inlined_call_operand.vmem [shape: f32[2,16,1], index: 4, kind: input, shape index: {}]
  %s5 = inlined_call_operand.vmem [shape: f32[2,16,1], index: 5, kind: input, shape index: {}]
  %s6 = inlined_call_operand.vmem [shape: f32[2,1,128], index: 6, kind: input, shape index: {}]
  %s7 = inlined_call_operand.vmem [shape: f32[2,1,128], index: 7, kind: input, shape index: {}]
  %s8 = inlined_call_operand.vmem [shape: f32[2,16,128], index: 8, kind: input, shape index: {}]
  %s9 = inlined_call_operand.vmem [shape: f32[2,16,128], index: 9, kind: input, shape index: {}]
  %s10 = inlined_call_operand.hbm [shape: f32[2,16,128], index: 10, kind: output, shape index: {0}]
  %s11 = inlined_call_operand.hbm [shape: f32[2,16,128], index: 11, kind: output, shape index: {1}]
  %12 = xla_tuple %s10, %s11
  %s13 = sld [smem:[#allocation0]]
  $region58: #{tpu_custom_call.1} parent=0
    _
  %s15 = ssub.s32 1, %s13
  %s16 = scalar_select 0, %s15, %s13
  $region1: #{tpu_custom_call.1} parent=0
    #allocation2 [shape = 'u8[16384]{0}', space=vmem, size = 0x4000, scoped, tag = 'output window, operand 0, single buffered']
    #allocation3 [shape = 's32[1]{0}', space=sflag, size = 0x4, scoped, tag = 'scoped memory for tpu_custom_call.1']
    #allocation4 [shape = 'u8[16384]{0}', space=vmem, size = 0x4000, scoped, tag = 'output window, operand 1, single buffered']
    #allocation5 [shape = 's32[1]{0}', space=sflag, size = 0x4, scoped, tag = 'scoped memory for tpu_custom_call.1']
    %17 = vsyncpa [#allocation3], 0
    %18 = vsyncpa [#allocation5], 0
    // Predicated region
    $region2: #{tpu_custom_call.1} parent=1 // pred_check
      _
    $region3: #{tpu_custom_call.1} parent=1 // pred_check_branch
      %20 = sbr.rel (0) target = $region5
    $region4: #{tpu_custom_call.1} parent=1 // pred_region
      _
    $region5: #{tpu_custom_call.1} parent=1 // pred_fallthru
      _
    // Predicated region
    $region6: #{tpu_custom_call.1} parent=1 // pred_check
      _
    $region7: #{tpu_custom_call.1} parent=1 // pred_check_branch
      %22 = sbr.rel (0) target = $region9
    $region8: #{tpu_custom_call.1} parent=1 // pred_region
      _
    $region9: #{tpu_custom_call.1} parent=1 // pred_fallthru
      _
    // Predicated region
    $region10: #{tpu_custom_call.1} parent=1 // pred_check
      _
    $region11: #{tpu_custom_call.1} parent=1 // pred_check_branch
      %24 = sbr.rel (0) target = $region13
    $region12: #{tpu_custom_call.1} parent=1 // pred_region
      _
    $region13: #{tpu_custom_call.1} parent=1 // pred_fallthru
      _
    // Predicated region
    $region14: #{tpu_custom_call.1} parent=1 // pred_check
      _
    $region15: #{tpu_custom_call.1} parent=1 // pred_check_branch
      %26 = sbr.rel (0) target = $region17
    $region16: #{tpu_custom_call.1} parent=1 // pred_region
      _
    $region17: #{tpu_custom_call.1} parent=1 // pred_fallthru
      _
    // Predicated region
    $region18: #{tpu_custom_call.1} parent=1 // pred_check
      _
    $region19: #{tpu_custom_call.1} parent=1 // pred_check_branch
      %28 = sbr.rel (0) target = $region21
    $region20: #{tpu_custom_call.1} parent=1 // pred_region
      _
    $region21: #{tpu_custom_call.1} parent=1 // pred_fallthru
      _
    // Predicated region
    $region22: #{tpu_custom_call.1} parent=1 // pred_check
      _
    $region23: #{tpu_custom_call.1} parent=1 // pred_check_branch
      %30 = sbr.rel (0) target = $region25
    $region24: #{tpu_custom_call.1} parent=1 // pred_region
      _
    $region25: #{tpu_custom_call.1} parent=1 // pred_fallthru
      _
    // Predicated region
    $region26: #{tpu_custom_call.1} parent=1 // pred_check
      _
    $region27: #{tpu_custom_call.1} parent=1 // pred_check_branch
      %32 = sbr.rel (0) target = $region29
    $region28: #{tpu_custom_call.1} parent=1 // pred_region
      _
    $region29: #{tpu_custom_call.1} parent=1 // pred_fallthru
      _
    // Predicated region
    $region30: #{tpu_custom_call.1} parent=1 // pred_check
      _
    $region31: #{tpu_custom_call.1} parent=1 // pred_check_branch
      %34 = sbr.rel (0) target = $region33
    $region32: #{tpu_custom_call.1} parent=1 // pred_region
      _
    $region33: #{tpu_custom_call.1} parent=1 // pred_fallthru
      _
    // Predicated region
    $region34: #{tpu_custom_call.1} parent=1 // pred_check
      _
    $region35: #{tpu_custom_call.1} parent=1 // pred_check_branch
      %36 = sbr.rel (0) target = $region37
    $region36: #{tpu_custom_call.1} parent=1 // pred_region
      _
    $region37: #{tpu_custom_call.1} parent=1 // pred_fallthru
      _
    // Predicated region
    $region38: #{tpu_custom_call.1} parent=1 // pred_check
      _
    $region39: #{tpu_custom_call.1} parent=1 // pred_check_branch
      %38 = sbr.rel (0) target = $region41
    $region40: #{tpu_custom_call.1} parent=1 // pred_region
      _
    $region41: #{tpu_custom_call.1} parent=1 // pred_fallthru
      _
    %v39 = vld [vmem:[%s0] sm:$0xff]
    %v40 = vld [vmem:[%s0 + $0x8] sm:$0xff]
    %v41 = vld [vmem:[%s1] sm:$0xff]
    %v42 = vld [vmem:[%s1 + $0x8] sm:$0xff]
    %v43 = vld [vmem:[%s2] sm:$0xff]
    %v44 = vld [vmem:[%s2 + $0x8] sm:$0xff]
    %v45 = vld [vmem:[%s2 + $0x10] sm:$0xff]
    %v46 = vld [vmem:[%s2 + $0x18] sm:$0xff]
    %v47 = vld [vmem:[%s3] sm:$0xff]
    %v48 = vld [vmem:[%s3 + $0x8] sm:$0xff]
    %v49 = vld [vmem:[%s3 + $0x10] sm:$0xff]
    %v50 = vld [vmem:[%s3 + $0x18] sm:$0xff]
    %v51 = vld [vmem:[%s4] sm:$0xff]
    %v52 = vld [vmem:[%s4 + $0x8] sm:$0xff]
    %v53 = vld [vmem:[%s4 + $0x10] sm:$0xff]
    %v54 = vld [vmem:[%s4 + $0x18] sm:$0xff]
    %v55 = vld [vmem:[%s5] sm:$0xff]
    %v56 = vld [vmem:[%s5 + $0x8] sm:$0xff]
    %v57 = vld [vmem:[%s5 + $0x10] sm:$0xff]
    %v58 = vld [vmem:[%s5 + $0x18] sm:$0xff]
    %v59 = vld [vmem:[%s6] sm:$0x1]
    %v60 = vld [vmem:[%s6 + $0x1] sm:$0x1]
    %v61 = vld [vmem:[%s7] sm:$0x1]
    %v62 = vld [vmem:[%s7 + $0x1] sm:$0x1]
    %v63 = vld [vmem:[%s8] sm:$0xff]
    %v64 = vld [vmem:[%s8 + $0x8] sm:$0xff]
    %v65 = vld [vmem:[%s8 + $0x10] sm:$0xff]
    %v66 = vld [vmem:[%s8 + $0x18] sm:$0xff]
    %v67 = vld [vmem:[%s9] sm:$0xff]
    %v68 = vld [vmem:[%s9 + $0x8] sm:$0xff]
    %v69 = vld [vmem:[%s9 + $0x10] sm:$0xff]
    %v70 = vld [vmem:[%s9 + $0x18] sm:$0xff]
    %72 = vset.pattern.permute.xlu0 0
    %73 = vperm.xlu0 %72, %v43
    %v74 = vpop.permute.xlu0 %73
    %77 = vset.pattern.permute.xlu0 0
    %78 = vperm.xlu0 %77, %v44
    %v79 = vpop.permute.xlu0 %78
    %82 = vset.pattern.permute.xlu0 0
    %83 = vperm.xlu0 %82, %v45
    %v84 = vpop.permute.xlu0 %83
    %87 = vset.pattern.permute.xlu0 0
    %88 = vperm.xlu0 %87, %v46
    %v89 = vpop.permute.xlu0 %88
    %v91 = vmul.f32 %v39, %v74
    %v92 = vmul.f32 %v40, %v79
    %v93 = vmul.f32 %v39, %v84
    %v94 = vmul.f32 %v40, %v89
    %96 = vset.pattern.permute.xlu0 0
    %97 = vperm.xlu0 %96, %v47
    %v98 = vpop.permute.xlu0 %97
    %101 = vset.pattern.permute.xlu0 0
    %102 = vperm.xlu0 %101, %v48
    %v103 = vpop.permute.xlu0 %102
    %106 = vset.pattern.permute.xlu0 0
    %107 = vperm.xlu0 %106, %v49
    %v108 = vpop.permute.xlu0 %107
    %111 = vset.pattern.permute.xlu0 0
    %112 = vperm.xlu0 %111, %v50
    %v113 = vpop.permute.xlu0 %112
    %v115 = vmul.f32 %v41, %v98
    %v116 = vmul.f32 %v42, %v103
    %v117 = vmul.f32 %v41, %v108
    %v118 = vmul.f32 %v42, %v113
    %v119 = vsub.f32 %v91, %v115
    %v120 = vsub.f32 %v92, %v116
    %v121 = vsub.f32 %v93, %v117
    %v122 = vsub.f32 %v94, %v118
    %v123 = vmul.f32 %v39, %v98
    %v124 = vmul.f32 %v40, %v103
    %v125 = vmul.f32 %v39, %v108
    %v126 = vmul.f32 %v40, %v113
    %v127 = vmul.f32 %v41, %v74
    %v128 = vmul.f32 %v42, %v79
    %v129 = vmul.f32 %v41, %v84
    %v130 = vmul.f32 %v42, %v89
    %v131 = vadd.f32 %v123, %v127
    %v132 = vadd.f32 %v124, %v128
    %v133 = vadd.f32 %v125, %v129
    %v134 = vadd.f32 %v126, %v130
    %v135 = vsub.f32 0.0, %v119
    %v136 = vsub.f32 0.0, %v120
    %v137 = vsub.f32 0.0, %v121
    %v138 = vsub.f32 0.0, %v122
    %v139 = vmul.f32 %v135, 1.442695
    %v140 = vpow.pop %v139
    %v141 = vmul.f32 %v136, 1.442695
    %v142 = vpow.pop %v141
    %v143 = vmul.f32 %v137, 1.442695
    %v144 = vpow.pop %v143
    %v145 = vmul.f32 %v138, 1.442695
    %v146 = vpow.pop %v145
    %v147 = vand.u32 2147483647, %v131
    %vm148 = vcmp.le.f32.partialorder %v147, 0.7853982
    %vm149 = vcmp.lt.s32.totalorder %v131, 0
    %v150 = vand.u32 %v131, 2139095040
    %v151 = vshrl.u32 %v150, 23
    %v152 = vsub.s32 %v151, 127
    %v153 = vand.u32 2147483647, %v131
    %v154 = vand.u32 %v153, 8388607
    %v155 = vor.u32 %v154, 8388608
    %v156 = vsub.s32 0, %v155
    %v157 = vadd.s32 %v152, 1
    %vm158 = vcmp.gt.s32.totalorder %v157, 0
    %v159 = vsel %vm158, %v157, 0
    %v160 = vshrl.u32 %v159, 5
    %v161 = vand.u32 %v159, 31
    %v162 = vsub.s32 32, %v161
    %v163 = vshrl.u32 683565275, %v162
    %v164 = vshll.u32 683565275, %v161
    %v165 = vshrl.u32 2475754826, %v162
    %v166 = vor.u32 %v164, %v165
    %v167 = vshll.u32 2475754826, %v161
    %v168 = vshrl.u32 2131351028, %v162
    %v169 = vor.u32 %v167, %v168
    %v170 = vshll.u32 2131351028, %v161
    %v171 = vshrl.u32 2102212464, %v162
    %v172 = vor.u32 %v170, %v171
    %v173 = vshll.u32 2102212464, %v161
    %v174 = vshrl.u32 920167782, %v162
    %v175 = vor.u32 %v173, %v174
    %v176 = vshll.u32 920167782, %v161
    %v177 = vshrl.u32 1326507024, %v162
    %v178 = vor.u32 %v176, %v177
    %vm179 = vcmp.lt.s32.totalorder %v160, 1
    %vm180 = vcmp.lt.s32.totalorder %v160, 2
    %vm181 = vcmp.lt.s32.totalorder %v160, 3
    %vm182 = vcmp.lt.s32.totalorder %v160, 4
    %v183 = vsel %vm179, %v163, %v166
    %v184 = vsel %vm182, %v172, 2102212464
    %v185 = vsel %vm181, %v169, %v184
    %v186 = vsel %vm180, %v183, %v185
    %v187 = vsel %vm179, %v166, %v169
    %v188 = vsel %vm182, %v175, 920167782
    %v189 = vsel %vm181, %v172, %v188
    %v190 = vsel %vm180, %v187, %v189
    %v191 = vsel %vm179, %v169, %v172
    %v192 = vsel %vm182, %v178, 1326507024
    %v193 = vsel %vm181, %v175, %v192
    %v194 = vsel %vm180, %v191, %v193
    %v195 = vshll.u32 %v155, 8
    %v196 = vand.u32 %v195, 65535
    %v197 = vshrl.u32 %v195, 16
    %v198 = vand.u32 %v194, 65535
    %v199 = vshrl.u32 %v194, 16
    %v200 = vmul.u32 %v196, %v198
    %v201 = vmul.u32 %v196, %v199
    %v202 = vmul.u32 %v197, %v198
    %v203 = vmul.u32 %v197, %v199
    %v204 = vshll.u32 %v201, 16
    %v205 = vshrl.u32 %v201, 16
    %v206 = vshll.u32 %v202, 16
    %v207 = vshrl.u32 %v202, 16
    %vm208 = vc.u32 %v200, %v204
    %v209 = vsel %vm208, 1, 0
    %v210 = vadd.s32 %v200, %v204
    %v211 = vadd.s32 %v203, %v209
    %vm212 = vc.u32 %v210, %v206
    %v213 = vsel %vm212, 1, 0
    %v214 = vadd.s32 %v210, %v206
    %v215 = vadd.s32 %v211, %v213
    %v216 = vadd.s32 %v215, %v205
    %v217 = vadd.s32 %v216, %v207
    %v218 = vand.u32 %v195, 65535
    %v219 = vshrl.u32 %v195, 16
    %v220 = vand.u32 %v190, 65535
    %v221 = vshrl.u32 %v190, 16
    %v222 = vmul.u32 %v218, %v220
    %v223 = vmul.u32 %v218, %v221
    %v224 = vmul.u32 %v219, %v220
    %v225 = vmul.u32 %v219, %v221
    %v226 = vshll.u32 %v223, 16
    %v227 = vshrl.u32 %v223, 16
    %v228 = vshll.u32 %v224, 16
    %v229 = vshrl.u32 %v224, 16
    %vm230 = vc.u32 %v222, %v226
    %v231 = vsel %vm230, 1, 0
    %v232 = vadd.s32 %v222, %v226
    %v233 = vadd.s32 %v225, %v231
    %vm234 = vc.u32 %v232, %v228
    %v235 = vsel %vm234, 1, 0
    %v236 = vadd.s32 %v232, %v228
    %v237 = vadd.s32 %v233, %v235
    %v238 = vadd.s32 %v237, %v227
    %v239 = vadd.s32 %v238, %v229
    %v240 = vmul.u32 %v195, %v186
    %v241 = vadd.s32 %v217, %v236
    %vm242 = vc.u32 %v217, %v236
    %v243 = vadd.s32 %v239, 1
    %v244 = vsel %vm242, %v243, %v239
    %v245 = vadd.s32 %v240, %v244
    %v246 = vadd.s32 %v245, 536870912
    %v247 = vshrl.u32 %v246, 30
    %v248 = vshll.u32 %v247, 30
    %v249 = vsub.s32 %v245, %v248
    %vm250 = vcmp.lt.s32.totalorder %v249, 0
    %v251 = vsub.s32 0, %v249
    %v252 = vsel %vm250, %v251, %v249
    %v253 = vclz %v252
    %v254 = vsub.s32 %v253, 2
    %vm255 = vcmp.gt.s32.totalorder 0, %v254
    %v256 = vsel %vm255, 0, %v254
    %v257 = vsub.s32 32, %v256
    %v258 = vshll.u32 %v249, %v256
    %v259 = vshrl.u32 %v241, %v257
    %v260 = vor.u32 %v258, %v259
    %v261 = vsub.s32 4294967266, %v256
    %v262 = vadd.s32 %v261, 127
    %v263 = vshll.u32 %v262, 23
    %v264 = vor.u32 4788187, %v263
    %v265 = vand.u32 2147483647, %v264
    %v267 = vcvt.s32.f32 %v260
    %v268 = vmul.f32 %v267, %v265
    %v269 = vxor.u32 %v268, 2147483648
    %v270 = vsel %vm149, %v269, %v268
    %v271 = vsub.s32 4, %v247
    %v272 = vsel %vm149, %v271, %v247
    %v273 = vsel %vm148, %v131, %v270
    %v274 = vsel %vm148, 0, %v272
    %v275 = vmul.f32 %v273, %v273
    %v276 = vmul.f32 %v275, -0.001358992
    %v277 = vadd.f32 %v276, 0.041655596
    %v278 = vmul.f32 %v275, %v277
    %v279 = vadd.f32 %v278, -0.4999988
    %v280 = vmul.f32 %v275, %v279
    %v281 = vadd.f32 1.0, %v280
    %v282 = vmul.f32 %v273, %v273
    %v283 = vmul.f32 %v282, -0.00019511016
    %v284 = vadd.f32 %v283, 0.008332121
    %v285 = vmul.f32 %v282, %v284
    %v286 = vadd.f32 %v285, -0.16666654
    %v287 = vmul.f32 %v282, %v286
    %v288 = vadd.f32 %v287, 1.0
    %v289 = vmul.f32 %v288, %v273
    %vm290 = vweird.f32 %v131
    %v291 = vand.u32 %v274, 3
    %vm292 = vcmp.lt.s32.totalorder %v291, 2
    %vm293 = vcmp.eq.s32.totalorder %v291, 0
    %v294 = vxor.u32 %v289, 2147483648
    %v295 = vsel %vm293, %v281, %v294
    %vm296 = vcmp.eq.s32.totalorder %v291, 2
    %v297 = vxor.u32 %v281, 2147483648
    %v298 = vsel %vm296, %v297, %v289
    %v299 = vsel %vm292, %v295, %v298
    %v300 = vsel %vm290, nan, %v299
    %v301 = vand.u32 2147483647, %v132
    %vm302 = vcmp.le.f32.partialorder %v301, 0.7853982
    %vm303 = vcmp.lt.s32.totalorder %v132, 0
    %v304 = vand.u32 %v132, 2139095040
    %v305 = vshrl.u32 %v304, 23
    %v306 = vsub.s32 %v305, 127
    %v307 = vand.u32 2147483647, %v132
    %v308 = vand.u32 %v307, 8388607
    %v309 = vor.u32 %v308, 8388608
    %v310 = vsub.s32 0, %v309
    %v311 = vadd.s32 %v306, 1
    %vm312 = vcmp.gt.s32.totalorder %v311, 0
    %v313 = vsel %vm312, %v311, 0
    %v314 = vshrl.u32 %v313, 5
    %v315 = vand.u32 %v313, 31
    %v316 = vsub.s32 32, %v315
    %v317 = vshrl.u32 683565275, %v316
    %v318 = vshll.u32 683565275, %v315
    %v319 = vshrl.u32 2475754826, %v316
    %v320 = vor.u32 %v318, %v319
    %v321 = vshll.u32 2475754826, %v315
    %v322 = vshrl.u32 2131351028, %v316
    %v323 = vor.u32 %v321, %v322
    %v324 = vshll.u32 2131351028, %v315
    %v325 = vshrl.u32 2102212464, %v316
    %v326 = vor.u32 %v324, %v325
    %v327 = vshll.u32 2102212464, %v315
    %v328 = vshrl.u32 920167782, %v316
    %v329 = vor.u32 %v327, %v328
    %v330 = vshll.u32 920167782, %v315
    %v331 = vshrl.u32 1326507024, %v316
    %v332 = vor.u32 %v330, %v331
    %vm333 = vcmp.lt.s32.totalorder %v314, 1
    %vm334 = vcmp.lt.s32.totalorder %v314, 2
    %vm335 = vcmp.lt.s32.totalorder %v314, 3
    %vm336 = vcmp.lt.s32.totalorder %v314, 4
    %v337 = vsel %vm333, %v317, %v320
    %v338 = vsel %vm336, %v326, 2102212464
    %v339 = vsel %vm335, %v323, %v338
    %v340 = vsel %vm334, %v337, %v339
    %v341 = vsel %vm333, %v320, %v323
    %v342 = vsel %vm336, %v329, 920167782
    %v343 = vsel %vm335, %v326, %v342
    %v344 = vsel %vm334, %v341, %v343
    %v345 = vsel %vm333, %v323, %v326
    %v346 = vsel %vm336, %v332, 1326507024
    %v347 = vsel %vm335, %v329, %v346
    %v348 = vsel %vm334, %v345, %v347
    %v349 = vshll.u32 %v309, 8
    %v350 = vand.u32 %v349, 65535
    %v351 = vshrl.u32 %v349, 16
    %v352 = vand.u32 %v348, 65535
    %v353 = vshrl.u32 %v348, 16
    %v354 = vmul.u32 %v350, %v352
    %v355 = vmul.u32 %v350, %v353
    %v356 = vmul.u32 %v351, %v352
    %v357 = vmul.u32 %v351, %v353
    %v358 = vshll.u32 %v355, 16
    %v359 = vshrl.u32 %v355, 16
    %v360 = vshll.u32 %v356, 16
    %v361 = vshrl.u32 %v356, 16
    %vm362 = vc.u32 %v354, %v358
    %v363 = vsel %vm362, 1, 0
    %v364 = vadd.s32 %v354, %v358
    %v365 = vadd.s32 %v357, %v363
    %vm366 = vc.u32 %v364, %v360
    %v367 = vsel %vm366, 1, 0
    %v368 = vadd.s32 %v364, %v360
    %v369 = vadd.s32 %v365, %v367
    %v370 = vadd.s32 %v369, %v359
    %v371 = vadd.s32 %v370, %v361
    %v372 = vand.u32 %v349, 65535
    %v373 = vshrl.u32 %v349, 16
    %v374 = vand.u32 %v344, 65535
    %v375 = vshrl.u32 %v344, 16
    %v376 = vmul.u32 %v372, %v374
    %v377 = vmul.u32 %v372, %v375
    %v378 = vmul.u32 %v373, %v374
    %v379 = vmul.u32 %v373, %v375
    %v380 = vshll.u32 %v377, 16
    %v381 = vshrl.u32 %v377, 16
    %v382 = vshll.u32 %v378, 16
    %v383 = vshrl.u32 %v378, 16
    %vm384 = vc.u32 %v376, %v380
    %v385 = vsel %vm384, 1, 0
    %v386 = vadd.s32 %v376, %v380
    %v387 = vadd.s32 %v379, %v385
    %vm388 = vc.u32 %v386, %v382
    %v389 = vsel %vm388, 1, 0
    %v390 = vadd.s32 %v386, %v382
    %v391 = vadd.s32 %v387, %v389
    %v392 = vadd.s32 %v391, %v381
    %v393 = vadd.s32 %v392, %v383
    %v394 = vmul.u32 %v349, %v340
    %v395 = vadd.s32 %v371, %v390
    %vm396 = vc.u32 %v371, %v390
    %v397 = vadd.s32 %v393, 1
    %v398 = vsel %vm396, %v397, %v393
    %v399 = vadd.s32 %v394, %v398
    %v400 = vadd.s32 %v399, 536870912
    %v401 = vshrl.u32 %v400, 30
    %v402 = vshll.u32 %v401, 30
    %v403 = vsub.s32 %v399, %v402
    %vm404 = vcmp.lt.s32.totalorder %v403, 0
    %v405 = vsub.s32 0, %v403
    %v406 = vsel %vm404, %v405, %v403
    %v407 = vclz %v406
    %v408 = vsub.s32 %v407, 2
    %vm409 = vcmp.gt.s32.totalorder 0, %v408
    %v410 = vsel %vm409, 0, %v408
    %v411 = vsub.s32 32, %v410
    %v412 = vshll.u32 %v403, %v410
    %v413 = vshrl.u32 %v395, %v411
    %v414 = vor.u32 %v412, %v413
    %v415 = vsub.s32 4294967266, %v410
    %v416 = vadd.s32 %v415, 127
    %v417 = vshll.u32 %v416, 23
    %v418 = vor.u32 4788187, %v417
    %v419 = vand.u32 2147483647, %v418
    %v421 = vcvt.s32.f32 %v414
    %v422 = vmul.f32 %v421, %v419
    %v423 = vxor.u32 %v422, 2147483648
    %v424 = vsel %vm303, %v423, %v422
    %v425 = vsub.s32 4, %v401
    %v426 = vsel %vm303, %v425, %v401
    %v427 = vsel %vm302, %v132, %v424
    %v428 = vsel %vm302, 0, %v426
    %v429 = vmul.f32 %v427, %v427
    %v430 = vmul.f32 %v429, -0.001358992
    %v431 = vadd.f32 %v430, 0.041655596
    %v432 = vmul.f32 %v429, %v431
    %v433 = vadd.f32 %v432, -0.4999988
    %v434 = vmul.f32 %v429, %v433
    %v435 = vadd.f32 1.0, %v434
    %v436 = vmul.f32 %v427, %v427
    %v437 = vmul.f32 %v436, -0.00019511016
    %v438 = vadd.f32 %v437, 0.008332121
    %v439 = vmul.f32 %v436, %v438
    %v440 = vadd.f32 %v439, -0.16666654
    %v441 = vmul.f32 %v436, %v440
    %v442 = vadd.f32 %v441, 1.0
    %v443 = vmul.f32 %v442, %v427
    %vm444 = vweird.f32 %v132
    %v445 = vand.u32 %v428, 3
    %vm446 = vcmp.lt.s32.totalorder %v445, 2
    %vm447 = vcmp.eq.s32.totalorder %v445, 0
    %v448 = vxor.u32 %v443, 2147483648
    %v449 = vsel %vm447, %v435, %v448
    %vm450 = vcmp.eq.s32.totalorder %v445, 2
    %v451 = vxor.u32 %v435, 2147483648
    %v452 = vsel %vm450, %v451, %v443
    %v453 = vsel %vm446, %v449, %v452
    %v454 = vsel %vm444, nan, %v453
    %v455 = vand.u32 2147483647, %v133
    %vm456 = vcmp.le.f32.partialorder %v455, 0.7853982
    %vm457 = vcmp.lt.s32.totalorder %v133, 0
    %v458 = vand.u32 %v133, 2139095040
    %v459 = vshrl.u32 %v458, 23
    %v460 = vsub.s32 %v459, 127
    %v461 = vand.u32 2147483647, %v133
    %v462 = vand.u32 %v461, 8388607
    %v463 = vor.u32 %v462, 8388608
    %v464 = vsub.s32 0, %v463
    %v465 = vadd.s32 %v460, 1
    %vm466 = vcmp.gt.s32.totalorder %v465, 0
    %v467 = vsel %vm466, %v465, 0
    %v468 = vshrl.u32 %v467, 5
    %v469 = vand.u32 %v467, 31
    %v470 = vsub.s32 32, %v469
    %v471 = vshrl.u32 683565275, %v470
    %v472 = vshll.u32 683565275, %v469
    %v473 = vshrl.u32 2475754826, %v470
    %v474 = vor.u32 %v472, %v473
    %v475 = vshll.u32 2475754826, %v469
    %v476 = vshrl.u32 2131351028, %v470
    %v477 = vor.u32 %v475, %v476
    %v478 = vshll.u32 2131351028, %v469
    %v479 = vshrl.u32 2102212464, %v470
    %v480 = vor.u32 %v478, %v479
    %v481 = vshll.u32 2102212464, %v469
    %v482 = vshrl.u32 920167782, %v470
    %v483 = vor.u32 %v481, %v482
    %v484 = vshll.u32 920167782, %v469
    %v485 = vshrl.u32 1326507024, %v470
    %v486 = vor.u32 %v484, %v485
    %vm487 = vcmp.lt.s32.totalorder %v468, 1
    %vm488 = vcmp.lt.s32.totalorder %v468, 2
    %vm489 = vcmp.lt.s32.totalorder %v468, 3
    %vm490 = vcmp.lt.s32.totalorder %v468, 4
    %v491 = vsel %vm487, %v471, %v474
    %v492 = vsel %vm490, %v480, 2102212464
    %v493 = vsel %vm489, %v477, %v492
    %v494 = vsel %vm488, %v491, %v493
    %v495 = vsel %vm487, %v474, %v477
    %v496 = vsel %vm490, %v483, 920167782
    %v497 = vsel %vm489, %v480, %v496
    %v498 = vsel %vm488, %v495, %v497
    %v499 = vsel %vm487, %v477, %v480
    %v500 = vsel %vm490, %v486, 1326507024
    %v501 = vsel %vm489, %v483, %v500
    %v502 = vsel %vm488, %v499, %v501
    %v503 = vshll.u32 %v463, 8
    %v504 = vand.u32 %v503, 65535
    %v505 = vshrl.u32 %v503, 16
    %v506 = vand.u32 %v502, 65535
    %v507 = vshrl.u32 %v502, 16
    %v508 = vmul.u32 %v504, %v506
    %v509 = vmul.u32 %v504, %v507
    %v510 = vmul.u32 %v505, %v506
    %v511 = vmul.u32 %v505, %v507
    %v512 = vshll.u32 %v509, 16
    %v513 = vshrl.u32 %v509, 16
    %v514 = vshll.u32 %v510, 16
    %v515 = vshrl.u32 %v510, 16
    %vm516 = vc.u32 %v508, %v512
    %v517 = vsel %vm516, 1, 0
    %v518 = vadd.s32 %v508, %v512
    %v519 = vadd.s32 %v511, %v517
    %vm520 = vc.u32 %v518, %v514
    %v521 = vsel %vm520, 1, 0
    %v522 = vadd.s32 %v518, %v514
    %v523 = vadd.s32 %v519, %v521
    %v524 = vadd.s32 %v523, %v513
    %v525 = vadd.s32 %v524, %v515
    %v526 = vand.u32 %v503, 65535
    %v527 = vshrl.u32 %v503, 16
    %v528 = vand.u32 %v498, 65535
    %v529 = vshrl.u32 %v498, 16
    %v530 = vmul.u32 %v526, %v528
    %v531 = vmul.u32 %v526, %v529
    %v532 = vmul.u32 %v527, %v528
    %v533 = vmul.u32 %v527, %v529
    %v534 = vshll.u32 %v531, 16
    %v535 = vshrl.u32 %v531, 16
    %v536 = vshll.u32 %v532, 16
    %v537 = vshrl.u32 %v532, 16
    %vm538 = vc.u32 %v530, %v534
    %v539 = vsel %vm538, 1, 0
    %v540 = vadd.s32 %v530, %v534
    %v541 = vadd.s32 %v533, %v539
    %vm542 = vc.u32 %v540, %v536
    %v543 = vsel %vm542, 1, 0
    %v544 = vadd.s32 %v540, %v536
    %v545 = vadd.s32 %v541, %v543
    %v546 = vadd.s32 %v545, %v535
    %v547 = vadd.s32 %v546, %v537
    %v548 = vmul.u32 %v503, %v494
    %v549 = vadd.s32 %v525, %v544
    %vm550 = vc.u32 %v525, %v544
    %v551 = vadd.s32 %v547, 1
    %v552 = vsel %vm550, %v551, %v547
    %v553 = vadd.s32 %v548, %v552
    %v554 = vadd.s32 %v553, 536870912
    %v555 = vshrl.u32 %v554, 30
    %v556 = vshll.u32 %v555, 30
    %v557 = vsub.s32 %v553, %v556
    %vm558 = vcmp.lt.s32.totalorder %v557, 0
    %v559 = vsub.s32 0, %v557
    %v560 = vsel %vm558, %v559, %v557
    %v561 = vclz %v560
    %v562 = vsub.s32 %v561, 2
    %vm563 = vcmp.gt.s32.totalorder 0, %v562
    %v564 = vsel %vm563, 0, %v562
    %v565 = vsub.s32 32, %v564
    %v566 = vshll.u32 %v557, %v564
    %v567 = vshrl.u32 %v549, %v565
    %v568 = vor.u32 %v566, %v567
    %v569 = vsub.s32 4294967266, %v564
    %v570 = vadd.s32 %v569, 127
    %v571 = vshll.u32 %v570, 23
    %v572 = vor.u32 4788187, %v571
    %v573 = vand.u32 2147483647, %v572
    %v575 = vcvt.s32.f32 %v568
    %v576 = vmul.f32 %v575, %v573
    %v577 = vxor.u32 %v576, 2147483648
    %v578 = vsel %vm457, %v577, %v576
    %v579 = vsub.s32 4, %v555
    %v580 = vsel %vm457, %v579, %v555
    %v581 = vsel %vm456, %v133, %v578
    %v582 = vsel %vm456, 0, %v580
    %v583 = vmul.f32 %v581, %v581
    %v584 = vmul.f32 %v583, -0.001358992
    %v585 = vadd.f32 %v584, 0.041655596
    %v586 = vmul.f32 %v583, %v585
    %v587 = vadd.f32 %v586, -0.4999988
    %v588 = vmul.f32 %v583, %v587
    %v589 = vadd.f32 1.0, %v588
    %v590 = vmul.f32 %v581, %v581
    %v591 = vmul.f32 %v590, -0.00019511016
    %v592 = vadd.f32 %v591, 0.008332121
    %v593 = vmul.f32 %v590, %v592
    %v594 = vadd.f32 %v593, -0.16666654
    %v595 = vmul.f32 %v590, %v594
    %v596 = vadd.f32 %v595, 1.0
    %v597 = vmul.f32 %v596, %v581
    %vm598 = vweird.f32 %v133
    %v599 = vand.u32 %v582, 3
    %vm600 = vcmp.lt.s32.totalorder %v599, 2
    %vm601 = vcmp.eq.s32.totalorder %v599, 0
    %v602 = vxor.u32 %v597, 2147483648
    %v603 = vsel %vm601, %v589, %v602
    %vm604 = vcmp.eq.s32.totalorder %v599, 2
    %v605 = vxor.u32 %v589, 2147483648
    %v606 = vsel %vm604, %v605, %v597
    %v607 = vsel %vm600, %v603, %v606
    %v608 = vsel %vm598, nan, %v607
    %v609 = vand.u32 2147483647, %v134
    %vm610 = vcmp.le.f32.partialorder %v609, 0.7853982
    %vm611 = vcmp.lt.s32.totalorder %v134, 0
    %v612 = vand.u32 %v134, 2139095040
    %v613 = vshrl.u32 %v612, 23
    %v614 = vsub.s32 %v613, 127
    %v615 = vand.u32 2147483647, %v134
    %v616 = vand.u32 %v615, 8388607
    %v617 = vor.u32 %v616, 8388608
    %v618 = vsub.s32 0, %v617
    %v619 = vadd.s32 %v614, 1
    %vm620 = vcmp.gt.s32.totalorder %v619, 0
    %v621 = vsel %vm620, %v619, 0
    %v622 = vshrl.u32 %v621, 5
    %v623 = vand.u32 %v621, 31
    %v624 = vsub.s32 32, %v623
    %v625 = vshrl.u32 683565275, %v624
    %v626 = vshll.u32 683565275, %v623
    %v627 = vshrl.u32 2475754826, %v624
    %v628 = vor.u32 %v626, %v627
    %v629 = vshll.u32 2475754826, %v623
    %v630 = vshrl.u32 2131351028, %v624
    %v631 = vor.u32 %v629, %v630
    %v632 = vshll.u32 2131351028, %v623
    %v633 = vshrl.u32 2102212464, %v624
    %v634 = vor.u32 %v632, %v633
    %v635 = vshll.u32 2102212464, %v623
    %v636 = vshrl.u32 920167782, %v624
    %v637 = vor.u32 %v635, %v636
    %v638 = vshll.u32 920167782, %v623
    %v639 = vshrl.u32 1326507024, %v624
    %v640 = vor.u32 %v638, %v639
    %vm641 = vcmp.lt.s32.totalorder %v622, 1
    %vm642 = vcmp.lt.s32.totalorder %v622, 2
    %vm643 = vcmp.lt.s32.totalorder %v622, 3
    %vm644 = vcmp.lt.s32.totalorder %v622, 4
    %v645 = vsel %vm641, %v625, %v628
    %v646 = vsel %vm644, %v634, 2102212464
    %v647 = vsel %vm643, %v631, %v646
    %v648 = vsel %vm642, %v645, %v647
    %v649 = vsel %vm641, %v628, %v631
    %v650 = vsel %vm644, %v637, 920167782
    %v651 = vsel %vm643, %v634, %v650
    %v652 = vsel %vm642, %v649, %v651
    %v653 = vsel %vm641, %v631, %v634
    %v654 = vsel %vm644, %v640, 1326507024
    %v655 = vsel %vm643, %v637, %v654
    %v656 = vsel %vm642, %v653, %v655
    %v657 = vshll.u32 %v617, 8
    %v658 = vand.u32 %v657, 65535
    %v659 = vshrl.u32 %v657, 16
    %v660 = vand.u32 %v656, 65535
    %v661 = vshrl.u32 %v656, 16
    %v662 = vmul.u32 %v658, %v660
    %v663 = vmul.u32 %v658, %v661
    %v664 = vmul.u32 %v659, %v660
    %v665 = vmul.u32 %v659, %v661
    %v666 = vshll.u32 %v663, 16
    %v667 = vshrl.u32 %v663, 16
    %v668 = vshll.u32 %v664, 16
    %v669 = vshrl.u32 %v664, 16
    %vm670 = vc.u32 %v662, %v666
    %v671 = vsel %vm670, 1, 0
    %v672 = vadd.s32 %v662, %v666
    %v673 = vadd.s32 %v665, %v671
    %vm674 = vc.u32 %v672, %v668
    %v675 = vsel %vm674, 1, 0
    %v676 = vadd.s32 %v672, %v668
    %v677 = vadd.s32 %v673, %v675
    %v678 = vadd.s32 %v677, %v667
    %v679 = vadd.s32 %v678, %v669
    %v680 = vand.u32 %v657, 65535
    %v681 = vshrl.u32 %v657, 16
    %v682 = vand.u32 %v652, 65535
    %v683 = vshrl.u32 %v652, 16
    %v684 = vmul.u32 %v680, %v682
    %v685 = vmul.u32 %v680, %v683
    %v686 = vmul.u32 %v681, %v682
    %v687 = vmul.u32 %v681, %v683
    %v688 = vshll.u32 %v685, 16
    %v689 = vshrl.u32 %v685, 16
    %v690 = vshll.u32 %v686, 16
    %v691 = vshrl.u32 %v686, 16
    %vm692 = vc.u32 %v684, %v688
    %v693 = vsel %vm692, 1, 0
    %v694 = vadd.s32 %v684, %v688
    %v695 = vadd.s32 %v687, %v693
    %vm696 = vc.u32 %v694, %v690
    %v697 = vsel %vm696, 1, 0
    %v698 = vadd.s32 %v694, %v690
    %v699 = vadd.s32 %v695, %v697
    %v700 = vadd.s32 %v699, %v689
    %v701 = vadd.s32 %v700, %v691
    %v702 = vmul.u32 %v657, %v648
    %v703 = vadd.s32 %v679, %v698
    %vm704 = vc.u32 %v679, %v698
    %v705 = vadd.s32 %v701, 1
    %v706 = vsel %vm704, %v705, %v701
    %v707 = vadd.s32 %v702, %v706
    %v708 = vadd.s32 %v707, 536870912
    %v709 = vshrl.u32 %v708, 30
    %v710 = vshll.u32 %v709, 30
    %v711 = vsub.s32 %v707, %v710
    %vm712 = vcmp.lt.s32.totalorder %v711, 0
    %v713 = vsub.s32 0, %v711
    %v714 = vsel %vm712, %v713, %v711
    %v715 = vclz %v714
    %v716 = vsub.s32 %v715, 2
    %vm717 = vcmp.gt.s32.totalorder 0, %v716
    %v718 = vsel %vm717, 0, %v716
    %v719 = vsub.s32 32, %v718
    %v720 = vshll.u32 %v711, %v718
    %v721 = vshrl.u32 %v703, %v719
    %v722 = vor.u32 %v720, %v721
    %v723 = vsub.s32 4294967266, %v718
    %v724 = vadd.s32 %v723, 127
    %v725 = vshll.u32 %v724, 23
    %v726 = vor.u32 4788187, %v725
    %v727 = vand.u32 2147483647, %v726
    %v729 = vcvt.s32.f32 %v722
    %v730 = vmul.f32 %v729, %v727
    %v731 = vxor.u32 %v730, 2147483648
    %v732 = vsel %vm611, %v731, %v730
    %v733 = vsub.s32 4, %v709
    %v734 = vsel %vm611, %v733, %v709
    %v735 = vsel %vm610, %v134, %v732
    %v736 = vsel %vm610, 0, %v734
    %v737 = vmul.f32 %v735, %v735
    %v738 = vmul.f32 %v737, -0.001358992
    %v739 = vadd.f32 %v738, 0.041655596
    %v740 = vmul.f32 %v737, %v739
    %v741 = vadd.f32 %v740, -0.4999988
    %v742 = vmul.f32 %v737, %v741
    %v743 = vadd.f32 1.0, %v742
    %v744 = vmul.f32 %v735, %v735
    %v745 = vmul.f32 %v744, -0.00019511016
    %v746 = vadd.f32 %v745, 0.008332121
    %v747 = vmul.f32 %v744, %v746
    %v748 = vadd.f32 %v747, -0.16666654
    %v749 = vmul.f32 %v744, %v748
    %v750 = vadd.f32 %v749, 1.0
    %v751 = vmul.f32 %v750, %v735
    %vm752 = vweird.f32 %v134
    %v753 = vand.u32 %v736, 3
    %vm754 = vcmp.lt.s32.totalorder %v753, 2
    %vm755 = vcmp.eq.s32.totalorder %v753, 0
    %v756 = vxor.u32 %v751, 2147483648
    %v757 = vsel %vm755, %v743, %v756
    %vm758 = vcmp.eq.s32.totalorder %v753, 2
    %v759 = vxor.u32 %v743, 2147483648
    %v760 = vsel %vm758, %v759, %v751
    %v761 = vsel %vm754, %v757, %v760
    %v762 = vsel %vm752, nan, %v761
    %v763 = vmul.f32 %v140, %v300
    %v764 = vmul.f32 %v142, %v454
    %v765 = vmul.f32 %v144, %v608
    %v766 = vmul.f32 %v146, %v762
    %v767 = vand.u32 2147483647, %v131
    %vm768 = vcmp.le.f32.partialorder %v767, 0.7853982
    %vm769 = vcmp.lt.s32.totalorder %v131, 0
    %v770 = vand.u32 %v131, 2139095040
    %v771 = vshrl.u32 %v770, 23
    %v772 = vsub.s32 %v771, 127
    %v773 = vand.u32 2147483647, %v131
    %v774 = vand.u32 %v773, 8388607
    %v775 = vor.u32 %v774, 8388608
    %v776 = vsub.s32 0, %v775
    %v777 = vadd.s32 %v772, 1
    %vm778 = vcmp.gt.s32.totalorder %v777, 0
    %v779 = vsel %vm778, %v777, 0
    %v780 = vshrl.u32 %v779, 5
    %v781 = vand.u32 %v779, 31
    %v782 = vsub.s32 32, %v781
    %v783 = vshrl.u32 683565275, %v782
    %v784 = vshll.u32 683565275, %v781
    %v785 = vshrl.u32 2475754826, %v782
    %v786 = vor.u32 %v784, %v785
    %v787 = vshll.u32 2475754826, %v781
    %v788 = vshrl.u32 2131351028, %v782
    %v789 = vor.u32 %v787, %v788
    %v790 = vshll.u32 2131351028, %v781
    %v791 = vshrl.u32 2102212464, %v782
    %v792 = vor.u32 %v790, %v791
    %v793 = vshll.u32 2102212464, %v781
    %v794 = vshrl.u32 920167782, %v782
    %v795 = vor.u32 %v793, %v794
    %v796 = vshll.u32 920167782, %v781
    %v797 = vshrl.u32 1326507024, %v782
    %v798 = vor.u32 %v796, %v797
    %vm799 = vcmp.lt.s32.totalorder %v780, 1
    %vm800 = vcmp.lt.s32.totalorder %v780, 2
    %vm801 = vcmp.lt.s32.totalorder %v780, 3
    %vm802 = vcmp.lt.s32.totalorder %v780, 4
    %v803 = vsel %vm799, %v783, %v786
    %v804 = vsel %vm802, %v792, 2102212464
    %v805 = vsel %vm801, %v789, %v804
    %v806 = vsel %vm800, %v803, %v805
    %v807 = vsel %vm799, %v786, %v789
    %v808 = vsel %vm802, %v795, 920167782
    %v809 = vsel %vm801, %v792, %v808
    %v810 = vsel %vm800, %v807, %v809
    %v811 = vsel %vm799, %v789, %v792
    %v812 = vsel %vm802, %v798, 1326507024
    %v813 = vsel %vm801, %v795, %v812
    %v814 = vsel %vm800, %v811, %v813
    %v815 = vshll.u32 %v775, 8
    %v816 = vand.u32 %v815, 65535
    %v817 = vshrl.u32 %v815, 16
    %v818 = vand.u32 %v814, 65535
    %v819 = vshrl.u32 %v814, 16
    %v820 = vmul.u32 %v816, %v818
    %v821 = vmul.u32 %v816, %v819
    %v822 = vmul.u32 %v817, %v818
    %v823 = vmul.u32 %v817, %v819
    %v824 = vshll.u32 %v821, 16
    %v825 = vshrl.u32 %v821, 16
    %v826 = vshll.u32 %v822, 16
    %v827 = vshrl.u32 %v822, 16
    %vm828 = vc.u32 %v820, %v824
    %v829 = vsel %vm828, 1, 0
    %v830 = vadd.s32 %v820, %v824
    %v831 = vadd.s32 %v823, %v829
    %vm832 = vc.u32 %v830, %v826
    %v833 = vsel %vm832, 1, 0
    %v834 = vadd.s32 %v830, %v826
    %v835 = vadd.s32 %v831, %v833
    %v836 = vadd.s32 %v835, %v825
    %v837 = vadd.s32 %v836, %v827
    %v838 = vand.u32 %v815, 65535
    %v839 = vshrl.u32 %v815, 16
    %v840 = vand.u32 %v810, 65535
    %v841 = vshrl.u32 %v810, 16
    %v842 = vmul.u32 %v838, %v840
    %v843 = vmul.u32 %v838, %v841
    %v844 = vmul.u32 %v839, %v840
    %v845 = vmul.u32 %v839, %v841
    %v846 = vshll.u32 %v843, 16
    %v847 = vshrl.u32 %v843, 16
    %v848 = vshll.u32 %v844, 16
    %v849 = vshrl.u32 %v844, 16
    %vm850 = vc.u32 %v842, %v846
    %v851 = vsel %vm850, 1, 0
    %v852 = vadd.s32 %v842, %v846
    %v853 = vadd.s32 %v845, %v851
    %vm854 = vc.u32 %v852, %v848
    %v855 = vsel %vm854, 1, 0
    %v856 = vadd.s32 %v852, %v848
    %v857 = vadd.s32 %v853, %v855
    %v858 = vadd.s32 %v857, %v847
    %v859 = vadd.s32 %v858, %v849
    %v860 = vmul.u32 %v815, %v806
    %v861 = vadd.s32 %v837, %v856
    %vm862 = vc.u32 %v837, %v856
    %v863 = vadd.s32 %v859, 1
    %v864 = vsel %vm862, %v863, %v859
    %v865 = vadd.s32 %v860, %v864
    %v866 = vadd.s32 %v865, 536870912
    %v867 = vshrl.u32 %v866, 30
    %v868 = vshll.u32 %v867, 30
    %v869 = vsub.s32 %v865, %v868
    %vm870 = vcmp.lt.s32.totalorder %v869, 0
    %v871 = vsub.s32 0, %v869
    %v872 = vsel %vm870, %v871, %v869
    %v873 = vclz %v872
    %v874 = vsub.s32 %v873, 2
    %vm875 = vcmp.gt.s32.totalorder 0, %v874
    %v876 = vsel %vm875, 0, %v874
    %v877 = vsub.s32 32, %v876
    %v878 = vshll.u32 %v869, %v876
    %v879 = vshrl.u32 %v861, %v877
    %v880 = vor.u32 %v878, %v879
    %v881 = vsub.s32 4294967266, %v876
    %v882 = vadd.s32 %v881, 127
    %v883 = vshll.u32 %v882, 23
    %v884 = vor.u32 4788187, %v883
    %v885 = vand.u32 2147483647, %v884
    %v887 = vcvt.s32.f32 %v880
    %v888 = vmul.f32 %v887, %v885
    %v889 = vxor.u32 %v888, 2147483648
    %v890 = vsel %vm769, %v889, %v888
    %v891 = vsub.s32 4, %v867
    %v892 = vsel %vm769, %v891, %v867
    %v893 = vsel %vm768, %v131, %v890
    %v894 = vsel %vm768, 0, %v892
    %v895 = vmul.f32 %v893, %v893
    %v896 = vmul.f32 %v895, -0.001358992
    %v897 = vadd.f32 %v896, 0.041655596
    %v898 = vmul.f32 %v895, %v897
    %v899 = vadd.f32 %v898, -0.4999988
    %v900 = vmul.f32 %v895, %v899
    %v901 = vadd.f32 1.0, %v900
    %v902 = vmul.f32 %v893, %v893
    %v903 = vmul.f32 %v902, -0.00019511016
    %v904 = vadd.f32 %v903, 0.008332121
    %v905 = vmul.f32 %v902, %v904
    %v906 = vadd.f32 %v905, -0.16666654
    %v907 = vmul.f32 %v902, %v906
    %v908 = vadd.f32 %v907, 1.0
    %v909 = vmul.f32 %v908, %v893
    %vm910 = vweird.f32 %v131
    %v911 = vadd.s32 %v894, 3
    %v912 = vand.u32 %v911, 3
    %vm913 = vcmp.lt.s32.totalorder %v912, 2
    %vm914 = vcmp.eq.s32.totalorder %v912, 0
    %v915 = vxor.u32 %v909, 2147483648
    %v916 = vsel %vm914, %v901, %v915
    %vm917 = vcmp.eq.s32.totalorder %v912, 2
    %v918 = vxor.u32 %v901, 2147483648
    %v919 = vsel %vm917, %v918, %v909
    %v920 = vsel %vm913, %v916, %v919
    %v921 = vsel %vm910, nan, %v920
    %v922 = vand.u32 2147483647, %v132
    %vm923 = vcmp.le.f32.partialorder %v922, 0.7853982
    %vm924 = vcmp.lt.s32.totalorder %v132, 0
    %v925 = vand.u32 %v132, 2139095040
    %v926 = vshrl.u32 %v925, 23
    %v927 = vsub.s32 %v926, 127
    %v928 = vand.u32 2147483647, %v132
    %v929 = vand.u32 %v928, 8388607
    %v930 = vor.u32 %v929, 8388608
    %v931 = vsub.s32 0, %v930
    %v932 = vadd.s32 %v927, 1
    %vm933 = vcmp.gt.s32.totalorder %v932, 0
    %v934 = vsel %vm933, %v932, 0
    %v935 = vshrl.u32 %v934, 5
    %v936 = vand.u32 %v934, 31
    %v937 = vsub.s32 32, %v936
    %v938 = vshrl.u32 683565275, %v937
    %v939 = vshll.u32 683565275, %v936
    %v940 = vshrl.u32 2475754826, %v937
    %v941 = vor.u32 %v939, %v940
    %v942 = vshll.u32 2475754826, %v936
    %v943 = vshrl.u32 2131351028, %v937
    %v944 = vor.u32 %v942, %v943
    %v945 = vshll.u32 2131351028, %v936
    %v946 = vshrl.u32 2102212464, %v937
    %v947 = vor.u32 %v945, %v946
    %v948 = vshll.u32 2102212464, %v936
    %v949 = vshrl.u32 920167782, %v937
    %v950 = vor.u32 %v948, %v949
    %v951 = vshll.u32 920167782, %v936
    %v952 = vshrl.u32 1326507024, %v937
    %v953 = vor.u32 %v951, %v952
    %vm954 = vcmp.lt.s32.totalorder %v935, 1
    %vm955 = vcmp.lt.s32.totalorder %v935, 2
    %vm956 = vcmp.lt.s32.totalorder %v935, 3
    %vm957 = vcmp.lt.s32.totalorder %v935, 4
    %v958 = vsel %vm954, %v938, %v941
    %v959 = vsel %vm957, %v947, 2102212464
    %v960 = vsel %vm956, %v944, %v959
    %v961 = vsel %vm955, %v958, %v960
    %v962 = vsel %vm954, %v941, %v944
    %v963 = vsel %vm957, %v950, 920167782
    %v964 = vsel %vm956, %v947, %v963
    %v965 = vsel %vm955, %v962, %v964
    %v966 = vsel %vm954, %v944, %v947
    %v967 = vsel %vm957, %v953, 1326507024
    %v968 = vsel %vm956, %v950, %v967
    %v969 = vsel %vm955, %v966, %v968
    %v970 = vshll.u32 %v930, 8
    %v971 = vand.u32 %v970, 65535
    %v972 = vshrl.u32 %v970, 16
    %v973 = vand.u32 %v969, 65535
    %v974 = vshrl.u32 %v969, 16
    %v975 = vmul.u32 %v971, %v973
    %v976 = vmul.u32 %v971, %v974
    %v977 = vmul.u32 %v972, %v973
    %v978 = vmul.u32 %v972, %v974
    %v979 = vshll.u32 %v976, 16
    %v980 = vshrl.u32 %v976, 16
    %v981 = vshll.u32 %v977, 16
    %v982 = vshrl.u32 %v977, 16
    %vm983 = vc.u32 %v975, %v979
    %v984 = vsel %vm983, 1, 0
    %v985 = vadd.s32 %v975, %v979
    %v986 = vadd.s32 %v978, %v984
    %vm987 = vc.u32 %v985, %v981
    %v988 = vsel %vm987, 1, 0
    %v989 = vadd.s32 %v985, %v981
    %v990 = vadd.s32 %v986, %v988
    %v991 = vadd.s32 %v990, %v980
    %v992 = vadd.s32 %v991, %v982
    %v993 = vand.u32 %v970, 65535
    %v994 = vshrl.u32 %v970, 16
    %v995 = vand.u32 %v965, 65535
    %v996 = vshrl.u32 %v965, 16
    %v997 = vmul.u32 %v993, %v995
    %v998 = vmul.u32 %v993, %v996
    %v999 = vmul.u32 %v994, %v995
    %v1000 = vmul.u32 %v994, %v996
    %v1001 = vshll.u32 %v998, 16
    %v1002 = vshrl.u32 %v998, 16
    %v1003 = vshll.u32 %v999, 16
    %v1004 = vshrl.u32 %v999, 16
    %vm1005 = vc.u32 %v997, %v1001
    %v1006 = vsel %vm1005, 1, 0
    %v1007 = vadd.s32 %v997, %v1001
    %v1008 = vadd.s32 %v1000, %v1006
    %vm1009 = vc.u32 %v1007, %v1003
    %v1010 = vsel %vm1009, 1, 0
    %v1011 = vadd.s32 %v1007, %v1003
    %v1012 = vadd.s32 %v1008, %v1010
    %v1013 = vadd.s32 %v1012, %v1002
    %v1014 = vadd.s32 %v1013, %v1004
    %v1015 = vmul.u32 %v970, %v961
    %v1016 = vadd.s32 %v992, %v1011
    %vm1017 = vc.u32 %v992, %v1011
    %v1018 = vadd.s32 %v1014, 1
    %v1019 = vsel %vm1017, %v1018, %v1014
    %v1020 = vadd.s32 %v1015, %v1019
    %v1021 = vadd.s32 %v1020, 536870912
    %v1022 = vshrl.u32 %v1021, 30
    %v1023 = vshll.u32 %v1022, 30
    %v1024 = vsub.s32 %v1020, %v1023
    %vm1025 = vcmp.lt.s32.totalorder %v1024, 0
    %v1026 = vsub.s32 0, %v1024
    %v1027 = vsel %vm1025, %v1026, %v1024
    %v1028 = vclz %v1027
    %v1029 = vsub.s32 %v1028, 2
    %vm1030 = vcmp.gt.s32.totalorder 0, %v1029
    %v1031 = vsel %vm1030, 0, %v1029
    %v1032 = vsub.s32 32, %v1031
    %v1033 = vshll.u32 %v1024, %v1031
    %v1034 = vshrl.u32 %v1016, %v1032
    %v1035 = vor.u32 %v1033, %v1034
    %v1036 = vsub.s32 4294967266, %v1031
    %v1037 = vadd.s32 %v1036, 127
    %v1038 = vshll.u32 %v1037, 23
    %v1039 = vor.u32 4788187, %v1038
    %v1040 = vand.u32 2147483647, %v1039
    %v1042 = vcvt.s32.f32 %v1035
    %v1043 = vmul.f32 %v1042, %v1040
    %v1044 = vxor.u32 %v1043, 2147483648
    %v1045 = vsel %vm924, %v1044, %v1043
    %v1046 = vsub.s32 4, %v1022
    %v1047 = vsel %vm924, %v1046, %v1022
    %v1048 = vsel %vm923, %v132, %v1045
    %v1049 = vsel %vm923, 0, %v1047
    %v1050 = vmul.f32 %v1048, %v1048
    %v1051 = vmul.f32 %v1050, -0.001358992
    %v1052 = vadd.f32 %v1051, 0.041655596
    %v1053 = vmul.f32 %v1050, %v1052
    %v1054 = vadd.f32 %v1053, -0.4999988
    %v1055 = vmul.f32 %v1050, %v1054
    %v1056 = vadd.f32 1.0, %v1055
    %v1057 = vmul.f32 %v1048, %v1048
    %v1058 = vmul.f32 %v1057, -0.00019511016
    %v1059 = vadd.f32 %v1058, 0.008332121
    %v1060 = vmul.f32 %v1057, %v1059
    %v1061 = vadd.f32 %v1060, -0.16666654
    %v1062 = vmul.f32 %v1057, %v1061
    %v1063 = vadd.f32 %v1062, 1.0
    %v1064 = vmul.f32 %v1063, %v1048
    %vm1065 = vweird.f32 %v132
    %v1066 = vadd.s32 %v1049, 3
    %v1067 = vand.u32 %v1066, 3
    %vm1068 = vcmp.lt.s32.totalorder %v1067, 2
    %vm1069 = vcmp.eq.s32.totalorder %v1067, 0
    %v1070 = vxor.u32 %v1064, 2147483648
    %v1071 = vsel %vm1069, %v1056, %v1070
    %vm1072 = vcmp.eq.s32.totalorder %v1067, 2
    %v1073 = vxor.u32 %v1056, 2147483648
    %v1074 = vsel %vm1072, %v1073, %v1064
    %v1075 = vsel %vm1068, %v1071, %v1074
    %v1076 = vsel %vm1065, nan, %v1075
    %v1077 = vand.u32 2147483647, %v133
    %vm1078 = vcmp.le.f32.partialorder %v1077, 0.7853982
    %vm1079 = vcmp.lt.s32.totalorder %v133, 0
    %v1080 = vand.u32 %v133, 2139095040
    %v1081 = vshrl.u32 %v1080, 23
    %v1082 = vsub.s32 %v1081, 127
    %v1083 = vand.u32 2147483647, %v133
    %v1084 = vand.u32 %v1083, 8388607
    %v1085 = vor.u32 %v1084, 8388608
    %v1086 = vsub.s32 0, %v1085
    %v1087 = vadd.s32 %v1082, 1
    %vm1088 = vcmp.gt.s32.totalorder %v1087, 0
    %v1089 = vsel %vm1088, %v1087, 0
    %v1090 = vshrl.u32 %v1089, 5
    %v1091 = vand.u32 %v1089, 31
    %v1092 = vsub.s32 32, %v1091
    %v1093 = vshrl.u32 683565275, %v1092
    %v1094 = vshll.u32 683565275, %v1091
    %v1095 = vshrl.u32 2475754826, %v1092
    %v1096 = vor.u32 %v1094, %v1095
    %v1097 = vshll.u32 2475754826, %v1091
    %v1098 = vshrl.u32 2131351028, %v1092
    %v1099 = vor.u32 %v1097, %v1098
    %v1100 = vshll.u32 2131351028, %v1091
    %v1101 = vshrl.u32 2102212464, %v1092
    %v1102 = vor.u32 %v1100, %v1101
    %v1103 = vshll.u32 2102212464, %v1091
    %v1104 = vshrl.u32 920167782, %v1092
    %v1105 = vor.u32 %v1103, %v1104
    %v1106 = vshll.u32 920167782, %v1091
    %v1107 = vshrl.u32 1326507024, %v1092
    %v1108 = vor.u32 %v1106, %v1107
    %vm1109 = vcmp.lt.s32.totalorder %v1090, 1
    %vm1110 = vcmp.lt.s32.totalorder %v1090, 2
    %vm1111 = vcmp.lt.s32.totalorder %v1090, 3
    %vm1112 = vcmp.lt.s32.totalorder %v1090, 4
    %v1113 = vsel %vm1109, %v1093, %v1096
    %v1114 = vsel %vm1112, %v1102, 2102212464
    %v1115 = vsel %vm1111, %v1099, %v1114
    %v1116 = vsel %vm1110, %v1113, %v1115
    %v1117 = vsel %vm1109, %v1096, %v1099
    %v1118 = vsel %vm1112, %v1105, 920167782
    %v1119 = vsel %vm1111, %v1102, %v1118
    %v1120 = vsel %vm1110, %v1117, %v1119
    %v1121 = vsel %vm1109, %v1099, %v1102
    %v1122 = vsel %vm1112, %v1108, 1326507024
    %v1123 = vsel %vm1111, %v1105, %v1122
    %v1124 = vsel %vm1110, %v1121, %v1123
    %v1125 = vshll.u32 %v1085, 8
    %v1126 = vand.u32 %v1125, 65535
    %v1127 = vshrl.u32 %v1125, 16
    %v1128 = vand.u32 %v1124, 65535
    %v1129 = vshrl.u32 %v1124, 16
    %v1130 = vmul.u32 %v1126, %v1128
    %v1131 = vmul.u32 %v1126, %v1129
    %v1132 = vmul.u32 %v1127, %v1128
    %v1133 = vmul.u32 %v1127, %v1129
    %v1134 = vshll.u32 %v1131, 16
    %v1135 = vshrl.u32 %v1131, 16
    %v1136 = vshll.u32 %v1132, 16
    %v1137 = vshrl.u32 %v1132, 16
    %vm1138 = vc.u32 %v1130, %v1134
    %v1139 = vsel %vm1138, 1, 0
    %v1140 = vadd.s32 %v1130, %v1134
    %v1141 = vadd.s32 %v1133, %v1139
    %vm1142 = vc.u32 %v1140, %v1136
    %v1143 = vsel %vm1142, 1, 0
    %v1144 = vadd.s32 %v1140, %v1136
    %v1145 = vadd.s32 %v1141, %v1143
    %v1146 = vadd.s32 %v1145, %v1135
    %v1147 = vadd.s32 %v1146, %v1137
    %v1148 = vand.u32 %v1125, 65535
    %v1149 = vshrl.u32 %v1125, 16
    %v1150 = vand.u32 %v1120, 65535
    %v1151 = vshrl.u32 %v1120, 16
    %v1152 = vmul.u32 %v1148, %v1150
    %v1153 = vmul.u32 %v1148, %v1151
    %v1154 = vmul.u32 %v1149, %v1150
    %v1155 = vmul.u32 %v1149, %v1151
    %v1156 = vshll.u32 %v1153, 16
    %v1157 = vshrl.u32 %v1153, 16
    %v1158 = vshll.u32 %v1154, 16
    %v1159 = vshrl.u32 %v1154, 16
    %vm1160 = vc.u32 %v1152, %v1156
    %v1161 = vsel %vm1160, 1, 0
    %v1162 = vadd.s32 %v1152, %v1156
    %v1163 = vadd.s32 %v1155, %v1161
    %vm1164 = vc.u32 %v1162, %v1158
    %v1165 = vsel %vm1164, 1, 0
    %v1166 = vadd.s32 %v1162, %v1158
    %v1167 = vadd.s32 %v1163, %v1165
    %v1168 = vadd.s32 %v1167, %v1157
    %v1169 = vadd.s32 %v1168, %v1159
    %v1170 = vmul.u32 %v1125, %v1116
    %v1171 = vadd.s32 %v1147, %v1166
    %vm1172 = vc.u32 %v1147, %v1166
    %v1173 = vadd.s32 %v1169, 1
    %v1174 = vsel %vm1172, %v1173, %v1169
    %v1175 = vadd.s32 %v1170, %v1174
    %v1176 = vadd.s32 %v1175, 536870912
    %v1177 = vshrl.u32 %v1176, 30
    %v1178 = vshll.u32 %v1177, 30
    %v1179 = vsub.s32 %v1175, %v1178
    %vm1180 = vcmp.lt.s32.totalorder %v1179, 0
    %v1181 = vsub.s32 0, %v1179
    %v1182 = vsel %vm1180, %v1181, %v1179
    %v1183 = vclz %v1182
    %v1184 = vsub.s32 %v1183, 2
    %vm1185 = vcmp.gt.s32.totalorder 0, %v1184
    %v1186 = vsel %vm1185, 0, %v1184
    %v1187 = vsub.s32 32, %v1186
    %v1188 = vshll.u32 %v1179, %v1186
    %v1189 = vshrl.u32 %v1171, %v1187
    %v1190 = vor.u32 %v1188, %v1189
    %v1191 = vsub.s32 4294967266, %v1186
    %v1192 = vadd.s32 %v1191, 127
    %v1193 = vshll.u32 %v1192, 23
    %v1194 = vor.u32 4788187, %v1193
    %v1195 = vand.u32 2147483647, %v1194
    %v1197 = vcvt.s32.f32 %v1190
    %v1198 = vmul.f32 %v1197, %v1195
    %v1199 = vxor.u32 %v1198, 2147483648
    %v1200 = vsel %vm1079, %v1199, %v1198
    %v1201 = vsub.s32 4, %v1177
    %v1202 = vsel %vm1079, %v1201, %v1177
    %v1203 = vsel %vm1078, %v133, %v1200
    %v1204 = vsel %vm1078, 0, %v1202
    %v1205 = vmul.f32 %v1203, %v1203
    %v1206 = vmul.f32 %v1205, -0.001358992
    %v1207 = vadd.f32 %v1206, 0.041655596
    %v1208 = vmul.f32 %v1205, %v1207
    %v1209 = vadd.f32 %v1208, -0.4999988
    %v1210 = vmul.f32 %v1205, %v1209
    %v1211 = vadd.f32 1.0, %v1210
    %v1212 = vmul.f32 %v1203, %v1203
    %v1213 = vmul.f32 %v1212, -0.00019511016
    %v1214 = vadd.f32 %v1213, 0.008332121
    %v1215 = vmul.f32 %v1212, %v1214
    %v1216 = vadd.f32 %v1215, -0.16666654
    %v1217 = vmul.f32 %v1212, %v1216
    %v1218 = vadd.f32 %v1217, 1.0
    %v1219 = vmul.f32 %v1218, %v1203
    %vm1220 = vweird.f32 %v133
    %v1221 = vadd.s32 %v1204, 3
    %v1222 = vand.u32 %v1221, 3
    %vm1223 = vcmp.lt.s32.totalorder %v1222, 2
    %vm1224 = vcmp.eq.s32.totalorder %v1222, 0
    %v1225 = vxor.u32 %v1219, 2147483648
    %v1226 = vsel %vm1224, %v1211, %v1225
    %vm1227 = vcmp.eq.s32.totalorder %v1222, 2
    %v1228 = vxor.u32 %v1211, 2147483648
    %v1229 = vsel %vm1227, %v1228, %v1219
    %v1230 = vsel %vm1223, %v1226, %v1229
    %v1231 = vsel %vm1220, nan, %v1230
    %v1232 = vand.u32 2147483647, %v134
    %vm1233 = vcmp.le.f32.partialorder %v1232, 0.7853982
    %vm1234 = vcmp.lt.s32.totalorder %v134, 0
    %v1235 = vand.u32 %v134, 2139095040
    %v1236 = vshrl.u32 %v1235, 23
    %v1237 = vsub.s32 %v1236, 127
    %v1238 = vand.u32 2147483647, %v134
    %v1239 = vand.u32 %v1238, 8388607
    %v1240 = vor.u32 %v1239, 8388608
    %v1241 = vsub.s32 0, %v1240
    %v1242 = vadd.s32 %v1237, 1
    %vm1243 = vcmp.gt.s32.totalorder %v1242, 0
    %v1244 = vsel %vm1243, %v1242, 0
    %v1245 = vshrl.u32 %v1244, 5
    %v1246 = vand.u32 %v1244, 31
    %v1247 = vsub.s32 32, %v1246
    %v1248 = vshrl.u32 683565275, %v1247
    %v1249 = vshll.u32 683565275, %v1246
    %v1250 = vshrl.u32 2475754826, %v1247
    %v1251 = vor.u32 %v1249, %v1250
    %v1252 = vshll.u32 2475754826, %v1246
    %v1253 = vshrl.u32 2131351028, %v1247
    %v1254 = vor.u32 %v1252, %v1253
    %v1255 = vshll.u32 2131351028, %v1246
    %v1256 = vshrl.u32 2102212464, %v1247
    %v1257 = vor.u32 %v1255, %v1256
    %v1258 = vshll.u32 2102212464, %v1246
    %v1259 = vshrl.u32 920167782, %v1247
    %v1260 = vor.u32 %v1258, %v1259
    %v1261 = vshll.u32 920167782, %v1246
    %v1262 = vshrl.u32 1326507024, %v1247
    %v1263 = vor.u32 %v1261, %v1262
    %vm1264 = vcmp.lt.s32.totalorder %v1245, 1
    %vm1265 = vcmp.lt.s32.totalorder %v1245, 2
    %vm1266 = vcmp.lt.s32.totalorder %v1245, 3
    %vm1267 = vcmp.lt.s32.totalorder %v1245, 4
    %v1268 = vsel %vm1264, %v1248, %v1251
    %v1269 = vsel %vm1267, %v1257, 2102212464
    %v1270 = vsel %vm1266, %v1254, %v1269
    %v1271 = vsel %vm1265, %v1268, %v1270
    %v1272 = vsel %vm1264, %v1251, %v1254
    %v1273 = vsel %vm1267, %v1260, 920167782
    %v1274 = vsel %vm1266, %v1257, %v1273
    %v1275 = vsel %vm1265, %v1272, %v1274
    %v1276 = vsel %vm1264, %v1254, %v1257
    %v1277 = vsel %vm1267, %v1263, 1326507024
    %v1278 = vsel %vm1266, %v1260, %v1277
    %v1279 = vsel %vm1265, %v1276, %v1278
    %v1280 = vshll.u32 %v1240, 8
    %v1281 = vand.u32 %v1280, 65535
    %v1282 = vshrl.u32 %v1280, 16
    %v1283 = vand.u32 %v1279, 65535
    %v1284 = vshrl.u32 %v1279, 16
    %v1285 = vmul.u32 %v1281, %v1283
    %v1286 = vmul.u32 %v1281, %v1284
    %v1287 = vmul.u32 %v1282, %v1283
    %v1288 = vmul.u32 %v1282, %v1284
    %v1289 = vshll.u32 %v1286, 16
    %v1290 = vshrl.u32 %v1286, 16
    %v1291 = vshll.u32 %v1287, 16
    %v1292 = vshrl.u32 %v1287, 16
    %vm1293 = vc.u32 %v1285, %v1289
    %v1294 = vsel %vm1293, 1, 0
    %v1295 = vadd.s32 %v1285, %v1289
    %v1296 = vadd.s32 %v1288, %v1294
    %vm1297 = vc.u32 %v1295, %v1291
    %v1298 = vsel %vm1297, 1, 0
    %v1299 = vadd.s32 %v1295, %v1291
    %v1300 = vadd.s32 %v1296, %v1298
    %v1301 = vadd.s32 %v1300, %v1290
    %v1302 = vadd.s32 %v1301, %v1292
    %v1303 = vand.u32 %v1280, 65535
    %v1304 = vshrl.u32 %v1280, 16
    %v1305 = vand.u32 %v1275, 65535
    %v1306 = vshrl.u32 %v1275, 16
    %v1307 = vmul.u32 %v1303, %v1305
    %v1308 = vmul.u32 %v1303, %v1306
    %v1309 = vmul.u32 %v1304, %v1305
    %v1310 = vmul.u32 %v1304, %v1306
    %v1311 = vshll.u32 %v1308, 16
    %v1312 = vshrl.u32 %v1308, 16
    %v1313 = vshll.u32 %v1309, 16
    %v1314 = vshrl.u32 %v1309, 16
    %vm1315 = vc.u32 %v1307, %v1311
    %v1316 = vsel %vm1315, 1, 0
    %v1317 = vadd.s32 %v1307, %v1311
    %v1318 = vadd.s32 %v1310, %v1316
    %vm1319 = vc.u32 %v1317, %v1313
    %v1320 = vsel %vm1319, 1, 0
    %v1321 = vadd.s32 %v1317, %v1313
    %v1322 = vadd.s32 %v1318, %v1320
    %v1323 = vadd.s32 %v1322, %v1312
    %v1324 = vadd.s32 %v1323, %v1314
    %v1325 = vmul.u32 %v1280, %v1271
    %v1326 = vadd.s32 %v1302, %v1321
    %vm1327 = vc.u32 %v1302, %v1321
    %v1328 = vadd.s32 %v1324, 1
    %v1329 = vsel %vm1327, %v1328, %v1324
    %v1330 = vadd.s32 %v1325, %v1329
    %v1331 = vadd.s32 %v1330, 536870912
    %v1332 = vshrl.u32 %v1331, 30
    %v1333 = vshll.u32 %v1332, 30
    %v1334 = vsub.s32 %v1330, %v1333
    %vm1335 = vcmp.lt.s32.totalorder %v1334, 0
    %v1336 = vsub.s32 0, %v1334
    %v1337 = vsel %vm1335, %v1336, %v1334
    %v1338 = vclz %v1337
    %v1339 = vsub.s32 %v1338, 2
    %vm1340 = vcmp.gt.s32.totalorder 0, %v1339
    %v1341 = vsel %vm1340, 0, %v1339
    %v1342 = vsub.s32 32, %v1341
    %v1343 = vshll.u32 %v1334, %v1341
    %v1344 = vshrl.u32 %v1326, %v1342
    %v1345 = vor.u32 %v1343, %v1344
    %v1346 = vsub.s32 4294967266, %v1341
    %v1347 = vadd.s32 %v1346, 127
    %v1348 = vshll.u32 %v1347, 23
    %v1349 = vor.u32 4788187, %v1348
    %v1350 = vand.u32 2147483647, %v1349
    %v1352 = vcvt.s32.f32 %v1345
    %v1353 = vmul.f32 %v1352, %v1350
    %v1354 = vxor.u32 %v1353, 2147483648
    %v1355 = vsel %vm1234, %v1354, %v1353
    %v1356 = vsub.s32 4, %v1332
    %v1357 = vsel %vm1234, %v1356, %v1332
    %v1358 = vsel %vm1233, %v134, %v1355
    %v1359 = vsel %vm1233, 0, %v1357
    %v1360 = vmul.f32 %v1358, %v1358
    %v1361 = vmul.f32 %v1360, -0.001358992
    %v1362 = vadd.f32 %v1361, 0.041655596
    %v1363 = vmul.f32 %v1360, %v1362
    %v1364 = vadd.f32 %v1363, -0.4999988
    %v1365 = vmul.f32 %v1360, %v1364
    %v1366 = vadd.f32 1.0, %v1365
    %v1367 = vmul.f32 %v1358, %v1358
    %v1368 = vmul.f32 %v1367, -0.00019511016
    %v1369 = vadd.f32 %v1368, 0.008332121
    %v1370 = vmul.f32 %v1367, %v1369
    %v1371 = vadd.f32 %v1370, -0.16666654
    %v1372 = vmul.f32 %v1367, %v1371
    %v1373 = vadd.f32 %v1372, 1.0
    %v1374 = vmul.f32 %v1373, %v1358
    %vm1375 = vweird.f32 %v134
    %v1376 = vadd.s32 %v1359, 3
    %v1377 = vand.u32 %v1376, 3
    %vm1378 = vcmp.lt.s32.totalorder %v1377, 2
    %vm1379 = vcmp.eq.s32.totalorder %v1377, 0
    %v1380 = vxor.u32 %v1374, 2147483648
    %v1381 = vsel %vm1379, %v1366, %v1380
    %vm1382 = vcmp.eq.s32.totalorder %v1377, 2
    %v1383 = vxor.u32 %v1366, 2147483648
    %v1384 = vsel %vm1382, %v1383, %v1374
    %v1385 = vsel %vm1378, %v1381, %v1384
    %v1386 = vsel %vm1375, nan, %v1385
    %v1387 = vmul.f32 %v140, %v921
    %v1388 = vmul.f32 %v142, %v1076
    %v1389 = vmul.f32 %v144, %v1231
    %v1390 = vmul.f32 %v146, %v1386
    %v1391 = vsub.f32 0.0, %v1387
    %v1392 = vsub.f32 0.0, %v1388
    %v1393 = vsub.f32 0.0, %v1389
    %v1394 = vsub.f32 0.0, %v1390
    %v1397 = vperm.slane %v59, 0
    %v1398 = vperm.slane %v60, 0
    %v1401 = vmul.f32 %v1397, %v74
    %v1402 = vmul.f32 %v1397, %v79
    %v1403 = vmul.f32 %v1398, %v84
    %v1404 = vmul.f32 %v1398, %v89
    %v1407 = vperm.slane %v61, 0
    %v1408 = vperm.slane %v62, 0
    %v1411 = vmul.f32 %v1407, %v98
    %v1412 = vmul.f32 %v1407, %v103
    %v1413 = vmul.f32 %v1408, %v108
    %v1414 = vmul.f32 %v1408, %v113
    %v1415 = vsub.f32 %v1401, %v1411
    %v1416 = vsub.f32 %v1402, %v1412
    %v1417 = vsub.f32 %v1403, %v1413
    %v1418 = vsub.f32 %v1404, %v1414
    %v1419 = vmul.f32 %v1397, %v98
    %v1420 = vmul.f32 %v1397, %v103
    %v1421 = vmul.f32 %v1398, %v108
    %v1422 = vmul.f32 %v1398, %v113
    %v1423 = vmul.f32 %v1407, %v74
    %v1424 = vmul.f32 %v1407, %v79
    %v1425 = vmul.f32 %v1408, %v84
    %v1426 = vmul.f32 %v1408, %v89
    %v1427 = vadd.f32 %v1419, %v1423
    %v1428 = vadd.f32 %v1420, %v1424
    %v1429 = vadd.f32 %v1421, %v1425
    %v1430 = vadd.f32 %v1422, %v1426
    %v1431 = vmul.f32 %v763, %v63
    %v1432 = vmul.f32 %v764, %v64
    %v1433 = vmul.f32 %v765, %v65
    %v1434 = vmul.f32 %v766, %v66
    %v1435 = vmul.f32 %v1391, %v67
    %v1436 = vmul.f32 %v1392, %v68
    %v1437 = vmul.f32 %v1393, %v69
    %v1438 = vmul.f32 %v1394, %v70
    %v1439 = vsub.f32 %v1431, %v1435
    %v1440 = vsub.f32 %v1432, %v1436
    %v1441 = vsub.f32 %v1433, %v1437
    %v1442 = vsub.f32 %v1434, %v1438
    %1444 = vset.pattern.permute.xlu0 0
    %1445 = vperm.xlu0 %1444, %v51
    %v1446 = vpop.permute.xlu0 %1445
    %1449 = vset.pattern.permute.xlu0 0
    %1450 = vperm.xlu0 %1449, %v52
    %v1451 = vpop.permute.xlu0 %1450
    %1454 = vset.pattern.permute.xlu0 0
    %1455 = vperm.xlu0 %1454, %v53
    %v1456 = vpop.permute.xlu0 %1455
    %1459 = vset.pattern.permute.xlu0 0
    %1460 = vperm.xlu0 %1459, %v54
    %v1461 = vpop.permute.xlu0 %1460
    %v1463 = vmul.f32 %v1415, %v1446
    %v1464 = vmul.f32 %v1416, %v1451
    %v1465 = vmul.f32 %v1417, %v1456
    %v1466 = vmul.f32 %v1418, %v1461
    %1468 = vset.pattern.permute.xlu0 0
    %1469 = vperm.xlu0 %1468, %v55
    %v1470 = vpop.permute.xlu0 %1469
    %1473 = vset.pattern.permute.xlu0 0
    %1474 = vperm.xlu0 %1473, %v56
    %v1475 = vpop.permute.xlu0 %1474
    %1478 = vset.pattern.permute.xlu0 0
    %1479 = vperm.xlu0 %1478, %v57
    %v1480 = vpop.permute.xlu0 %1479
    %1483 = vset.pattern.permute.xlu0 0
    %1484 = vperm.xlu0 %1483, %v58
    %v1485 = vpop.permute.xlu0 %1484
    %v1487 = vmul.f32 %v1427, %v1470
    %v1488 = vmul.f32 %v1428, %v1475
    %v1489 = vmul.f32 %v1429, %v1480
    %v1490 = vmul.f32 %v1430, %v1485
    %v1491 = vsub.f32 %v1463, %v1487
    %v1492 = vsub.f32 %v1464, %v1488
    %v1493 = vsub.f32 %v1465, %v1489
    %v1494 = vsub.f32 %v1466, %v1490
    %v1495 = vadd.f32 %v1439, %v1491
    %v1496 = vadd.f32 %v1440, %v1492
    %v1497 = vadd.f32 %v1441, %v1493
    %v1498 = vadd.f32 %v1442, %v1494
    %v1499 = vmul.f32 %v763, %v67
    %v1500 = vmul.f32 %v764, %v68
    %v1501 = vmul.f32 %v765, %v69
    %v1502 = vmul.f32 %v766, %v70
    %v1503 = vmul.f32 %v1391, %v63
    %v1504 = vmul.f32 %v1392, %v64
    %v1505 = vmul.f32 %v1393, %v65
    %v1506 = vmul.f32 %v1394, %v66
    %v1507 = vadd.f32 %v1499, %v1503
    %v1508 = vadd.f32 %v1500, %v1504
    %v1509 = vadd.f32 %v1501, %v1505
    %v1510 = vadd.f32 %v1502, %v1506
    %v1511 = vmul.f32 %v1415, %v1470
    %v1512 = vmul.f32 %v1416, %v1475
    %v1513 = vmul.f32 %v1417, %v1480
    %v1514 = vmul.f32 %v1418, %v1485
    %v1515 = vmul.f32 %v1427, %v1446
    %v1516 = vmul.f32 %v1428, %v1451
    %v1517 = vmul.f32 %v1429, %v1456
    %v1518 = vmul.f32 %v1430, %v1461
    %v1519 = vadd.f32 %v1511, %v1515
    %v1520 = vadd.f32 %v1512, %v1516
    %v1521 = vadd.f32 %v1513, %v1517
    %v1522 = vadd.f32 %v1514, %v1518
    %v1523 = vadd.f32 %v1507, %v1519
    %v1524 = vadd.f32 %v1508, %v1520
    %v1525 = vadd.f32 %v1509, %v1521
    %v1526 = vadd.f32 %v1510, %v1522
    %1527 = vst [vmem:[#allocation2] sm:$0xff] %v1495
    %1528 = vst [vmem:[#allocation2 + $0x8] sm:$0xff] %v1496
    %1529 = vst [vmem:[#allocation2 + $0x10] sm:$0xff] %v1497
    %1530 = vst [vmem:[#allocation2 + $0x18] sm:$0xff] %v1498
    %1531 = vst [vmem:[#allocation4] sm:$0xff] %v1523
    %1532 = vst [vmem:[#allocation4 + $0x8] sm:$0xff] %v1524
    %1533 = vst [vmem:[#allocation4 + $0x10] sm:$0xff] %v1525
    %1534 = vst [vmem:[#allocation4 + $0x18] sm:$0xff] %v1526
    // Predicated region
    $region42: #{tpu_custom_call.1} parent=1 // pred_check
      _
    $region43: #{tpu_custom_call.1} parent=1 // pred_check_branch
      %1536 = sbr.rel (0) target = $region45
    $region44: #{tpu_custom_call.1} parent=1 // pred_region
      %1538 = vsyncadd [#allocation3], 0
      %s1539 = sshll.u32 [#allocation2], 4
      %s1540 = int_to_ptr.vmem [resolvable:$true] %s1539
      %s1541 = sshll.u32 %s10, 4
      %s1542 = int_to_ptr.hbm [resolvable:$true] %s1541
      %1547 = dma.vmem_to_hbm [thread:$0]  %s1540, 512, %s1542, [#allocation3], 128, 128, 8
    $region45: #{tpu_custom_call.1} parent=1 // pred_fallthru
      _
    // Predicated region
    $region46: #{tpu_custom_call.1} parent=1 // pred_check
      _
    $region47: #{tpu_custom_call.1} parent=1 // pred_check_branch
      %1549 = sbr.rel (0) target = $region49
    $region48: #{tpu_custom_call.1} parent=1 // pred_region
      %1551 = vsyncadd [#allocation5], 0
      %s1552 = sshll.u32 [#allocation4], 4
      %s1553 = int_to_ptr.vmem [resolvable:$true] %s1552
      %s1554 = sshll.u32 %s11, 4
      %s1555 = int_to_ptr.hbm [resolvable:$true] %s1554
      %1560 = dma.vmem_to_hbm [thread:$0]  %s1553, 512, %s1555, [#allocation5], 128, 128, 8
    $region49: #{tpu_custom_call.1} parent=1 // pred_fallthru
      _
    // Predicated region
    $region50: #{tpu_custom_call.1} parent=1 // pred_check
      _
    $region51: #{tpu_custom_call.1} parent=1 // pred_check_branch
      %1562 = sbr.rel (0) target = $region53
    $region52: #{tpu_custom_call.1} parent=1 // pred_region
      %1564 = dma.done [#allocation3], 512
    $region53: #{tpu_custom_call.1} parent=1 // pred_fallthru
      _
    // Predicated region
    $region54: #{tpu_custom_call.1} parent=1 // pred_check
      _
    $region55: #{tpu_custom_call.1} parent=1 // pred_check_branch
      %1566 = sbr.rel (0) target = $region57
    $region56: #{tpu_custom_call.1} parent=1 // pred_region
      %1568 = dma.done [#allocation5], 512
    $region57: #{tpu_custom_call.1} parent=1 // pred_fallthru
      _
    %1569 = vsyncpa [#allocation3], 1
    %1570 = vsyncpa [#allocation5], 1

</llo_original>
